<compile_context>
chip_gen: v7x
topology: tpu7x:2x2x1
jax: 0.10.0
libtpu: 0.0.40
codegen_flags: <defaults>
</compile_context>

<pallas_src>
import functools

import jax
import jax.numpy as jnp
from jax.experimental import pallas as pl
from jax.experimental.pallas import tpu as pltpu


# ---------------------------------------------------------------------------
# VMEM budgeting helpers (padded tile sizes).
# ---------------------------------------------------------------------------
def _pad_up(n, m):
    return -(-n // m) * m


def _tile_bytes(shape, dtype):
    """Bytes one tile really occupies in VMEM: last dim padded to 128 lanes,
    second-to-last padded to the dtype's sublane count (8 for f32, 16 for bf16)."""
    itemsize = jnp.dtype(dtype).itemsize
    sublane = max(1, 32 // itemsize)
    dims = list(shape)
    dims[-1] = _pad_up(dims[-1], 128)
    if len(dims) >= 2:
        dims[-2] = _pad_up(dims[-2], sublane)
    total = itemsize
    for s in dims:
        total *= s
    return total


def _step_vmem_bytes(tb, n, c_in, c_out, n_heads, in_dtype, w_dtype):
    """Padded VMEM footprint of one grid step (pipelined blocks + f32 temporaries)."""
    d = c_out // n_heads
    blocks = (3 * 2 * _tile_bytes((tb, n, c_in), in_dtype)      # q/k/v, double-buffered
              + 3 * 2 * _tile_bytes((c_in, c_out), w_dtype)     # weights
              + 3 * 2 * _tile_bytes((1, c_out), w_dtype)        # biases
              + 2 * _tile_bytes((tb, n, c_out), in_dtype))      # output, double-buffered
    f32 = jnp.float32
    temps = (8 * _tile_bytes((tb * n, c_out), f32)              # qp/kp/vp (+casts) + y
             + 3 * tb * _tile_bytes((n, n), f32)                # s / e / p per head
             + 2 * tb * _tile_bytes((n, d), f32))               # per-head outputs
    return blocks + temps


def _vmem_cap_bytes():
    phys = 64 * 2 ** 20                      # conservative default: v7x per-core VMEM
    try:
        info = pltpu.get_tpu_info()
        phys = int(getattr(info, "vmem_capacity_bytes", phys))
    except Exception:
        pass
    # Leave headroom for Mosaic internal scratch: ~48 MiB on v7x, ~96 MiB on v5e/v6e.
    return max(32 * 2 ** 20, (phys * 3) // 4)


def _pick_batch_tile(batch, n, c_in, c_out, n_heads, in_dtype, w_dtype, vmem_cap):
    """Largest divisor of `batch` that fills the MXU sublane rows (~512) and whose
    padded per-step footprint stays inside the VMEM cap."""
    best = 1
    for tb in range(1, batch + 1):
        if batch % tb:
            continue
        rows_ok = (tb * n <= 512) or (best * n < 256)
        fits = _step_vmem_bytes(tb, n, c_in, c_out, n_heads, in_dtype, w_dtype) <= vmem_cap
        if rows_ok and fits:
            best = tb
    return best


# ---------------------------------------------------------------------------
# Kernel.
# ---------------------------------------------------------------------------
def _mha_kernel(q_ref, k_ref, v_ref, wq_ref, bq_ref, wk_ref, bk_ref, wv_ref, bv_ref,
                o_ref, *, n_heads, inv_temp, residual_from_input):
    in_dtype = q_ref.dtype
    tb, n, c_in = q_ref.shape
    c_out = wq_ref.shape[-1]
    d = c_out // n_heads

    # Flatten the batch-tile rows onto the sublane axis -> one dense, full-width
    # projection matmul per input (f32 accumulation on the MXU).
    q_in = q_ref[...].reshape(tb * n, c_in)
    k_in = k_ref[...].reshape(tb * n, c_in)
    v_in = v_ref[...].reshape(tb * n, c_in)

    qp = jnp.dot(q_in, wq_ref[...], preferred_element_type=jnp.float32) + bq_ref[...]
    kp = jnp.dot(k_in, wk_ref[...], preferred_element_type=jnp.float32) + bk_ref[...]
    vp = jnp.dot(v_in, wv_ref[...], preferred_element_type=jnp.float32) + bv_ref[...]

    if residual_from_input:
        q_att = qp                      # 1/temperature already folded into wq/bq
    else:
        q_att = qp * inv_temp           # unscaled qp is needed below as the residual

    q_att = q_att.astype(in_dtype)
    k_att = kp.astype(in_dtype)
    v_att = vp.astype(in_dtype)

    # Per-head attention: small static loop (heads stay off the grid and off the HBM
    # layout); output assembled lane-dense before a single store.
    # TODO(synk): for large N, replace the materialized (TB, N, N) score tile with
    # flash-style KV tiling + online-softmax accumulators (size tiles for 64 MiB on v7x).
    head_outs = []
    for h in range(n_heads):
        sl = slice(h * d, (h + 1) * d)
        qh = q_att[:, sl].reshape(tb, n, d)
        kh = k_att[:, sl].reshape(tb, n, d)
        vh = v_att[:, sl].reshape(tb, n, d)

        s = jnp.einsum("bqd,bkd->bqk", qh, kh,
                       preferred_element_type=jnp.float32)          # (tb, n, n) f32
        m = jnp.max(s, axis=-1, keepdims=True)
        e = jnp.exp(s - m)
        denom = jnp.sum(e, axis=-1, keepdims=True)
        p = e * pl.reciprocal(denom, approx=True)
        # attention dropout: identity (eval mode)
        yh = jnp.einsum("bqk,bkd->bqd", p.astype(in_dtype), vh,
                        preferred_element_type=jnp.float32)         # (tb, n, d) f32
        head_outs.append(yh.reshape(tb * n, d))

    y = head_outs[0] if n_heads == 1 else jnp.concatenate(head_outs, axis=-1)

    # Residual straight from the VMEM-resident q block (raw q) or the projected q.
    res = q_in.astype(jnp.float32) if residual_from_input else qp
    o_ref[...] = (y + res).astype(o_ref.dtype).reshape(tb, n, c_out)


# ---------------------------------------------------------------------------
# Wrapper.
# ---------------------------------------------------------------------------
def multi_head_attention(q, k, v, params, *, n_heads):
    B, N, c_in = q.shape
    c_out = params["wq"].shape[1]
    assert c_out % n_heads == 0
    d = c_out // n_heads
    inv_temp = 1.0 / float(d ** 0.5)
    residual_from_input = (c_in == c_out)

    # Fold the softmax temperature into the q projection whenever the residual comes
    # from the raw input (trace-time constant fold over small weights).  When the
    # residual is the projected q, the unscaled projection is still needed, so the
    # scale is applied once in-kernel instead.
    if residual_from_input:
        wq_eff = params["wq"] * inv_temp
        bq_eff = params["bq"] * inv_temp
    else:
        wq_eff, bq_eff = params["wq"], params["bq"]

    vmem_cap = _vmem_cap_bytes()
    tb = _pick_batch_tile(B, N, c_in, c_out, n_heads, q.dtype, params["wq"].dtype,
                          vmem_cap)
    grid = (B // tb,)

    kernel = functools.partial(
        _mha_kernel,
        n_heads=n_heads,
        inv_temp=inv_temp,
        residual_from_input=residual_from_input,
    )

    qkv_spec = pl.BlockSpec((tb, N, c_in), lambda b: (b, 0, 0))
    w_spec = pl.BlockSpec((c_in, c_out), lambda b: (0, 0))     # constant across grid
    b_spec = pl.BlockSpec((1, c_out), lambda b: (0, 0))
    out_spec = pl.BlockSpec((tb, N, c_out), lambda b: (b, 0, 0))

    needed = _step_vmem_bytes(tb, N, c_in, c_out, n_heads, q.dtype, params["wq"].dtype)
    vmem_limit = int(min(vmem_cap, max(32 * 2 ** 20, 2 * needed)))

    out = pl.pallas_call(
        kernel,
        out_shape=jax.ShapeDtypeStruct((B, N, c_out), q.dtype),
        grid=grid,
        in_specs=[qkv_spec, qkv_spec, qkv_spec,
                  w_spec, b_spec, w_spec, b_spec, w_spec, b_spec],
        out_specs=out_spec,
        compiler_params=pltpu.CompilerParams(
            dimension_semantics=("parallel",),
            vmem_limit_bytes=vmem_limit,
        ),
    )(q, k, v, wq_eff, bq_eff, params["wk"], params["bk"], params["wv"], params["bv"])
    return out


# ---------------------------------------------------------------------------
# Pure-JAX reference (mirrors the PyTorch forward, eval mode, use_proj off).
# ---------------------------------------------------------------------------
def _reference(q, k, v, params, *, n_heads):
    B, N, c_in = q.shape
    c_out = params["wq"].shape[1]
    temperature = (c_out // n_heads) ** 0.5
    qp = q @ params["wq"] + params["bq"]
    kp = k @ params["wk"] + params["bk"]
    vp = v @ params["wv"] + params["bv"]
    q_res = q if c_in == c_out else qp
    d = c_out // n_heads
    qh = qp.reshape(B, N, n_heads, d).transpose(0, 2, 1, 3)
    kh = kp.reshape(B, N, n_heads, d).transpose(0, 2, 1, 3)
    vh = vp.reshape(B, N, n_heads, d).transpose(0, 2, 1, 3)
    attn = jnp.einsum("bhnd,bhmd->bhnm", qh, kh) / temperature
    attn = jax.nn.softmax(attn, axis=-1)
    y = jnp.einsum("bhnm,bhmd->bhnd", attn, vh).transpose(0, 2, 1, 3).reshape(B, N, c_out)
    return y + q_res


if __name__ == "__main__":
    # Small shapes: batch=2, num_points=16, in_channel=32, out_channel=32, n_heads=2
    B, N, C_IN, C_OUT, H = 2, 16, 32, 32, 2

    key = jax.random.PRNGKey(0)
    k_q, k_k, k_v, k_wq, k_wk, k_wv, k_bq, k_bk, k_bv = jax.random.split(key, 9)

    q = jax.random.normal(k_q, (B, N, C_IN), dtype=jnp.float32)
    k = jax.random.normal(k_k, (B, N, C_IN), dtype=jnp.float32)
    v = jax.random.normal(k_v, (B, N, C_IN), dtype=jnp.float32)

    # Deterministic synthetic parameters (shapes from nn.Linear(in_channel, out_channel),
    # stored transposed as (C_in, C_out)).
    params = {
        "wq": 0.1 * jax.random.normal(k_wq, (C_IN, C_OUT), dtype=jnp.float32),
        "wk": 0.1 * jax.random.normal(k_wk, (C_IN, C_OUT), dtype=jnp.float32),
        "wv": 0.1 * jax.random.normal(k_wv, (C_IN, C_OUT), dtype=jnp.float32),
        "bq": 0.05 * jax.random.normal(k_bq, (1, C_OUT), dtype=jnp.float32),
        "bk": 0.05 * jax.random.normal(k_bk, (1, C_OUT), dtype=jnp.float32),
        "bv": 0.05 * jax.random.normal(k_bv, (1, C_OUT), dtype=jnp.float32),
    }

    out = multi_head_attention(q, k, v, params, n_heads=H)
    out = jax.block_until_ready(out)

    ref = _reference(q, k, v, params, n_heads=H)
    assert out.shape == (B, N, C_OUT)
    # Tolerance loosened vs exact-divide: the softmax denominator uses the EUP
    # approximate reciprocal (pl.reciprocal(..., approx=True)).
    assert jnp.allclose(out, ref, rtol=2e-3, atol=2e-3), "mismatch vs JAX reference"

    print("KERNEL_OK")
</pallas_src>

<mosaic_0001>
module attributes {stable_mosaic.version = 11 : i64} {
  func.func @_mha_kernel(%arg0: i32, %arg1: memref<2x16x32xf32, #tpu.memory_space<vmem>>, %arg2: memref<2x16x32xf32, #tpu.memory_space<vmem>>, %arg3: memref<2x16x32xf32, #tpu.memory_space<vmem>>, %arg4: memref<32x32xf32, #tpu.memory_space<vmem>>, %arg5: memref<1x32xf32, #tpu.memory_space<vmem>>, %arg6: memref<32x32xf32, #tpu.memory_space<vmem>>, %arg7: memref<1x32xf32, #tpu.memory_space<vmem>>, %arg8: memref<32x32xf32, #tpu.memory_space<vmem>>, %arg9: memref<1x32xf32, #tpu.memory_space<vmem>>, %arg10: memref<2x16x32xf32, #tpu.memory_space<vmem>>) attributes {dimension_semantics = [#tpu.dimension_semantics<parallel>], iteration_bounds = array<i64: 1>, scalar_prefetch = 0 : i64, scratch_operands = 0 : i64, tpu.core_type = #tpu.core_type<tc>, window_params = [{transform_indices = @transform_0, window_bounds = array<i64: 2, 16, 32>}, {transform_indices = @transform_1, window_bounds = array<i64: 2, 16, 32>}, {transform_indices = @transform_2, window_bounds = array<i64: 2, 16, 32>}, {pipeline_mode = #tpu.pipeline_mode<synchronous>, transform_indices = @transform_3, window_bounds = array<i64: 32, 32>}, {pipeline_mode = #tpu.pipeline_mode<synchronous>, transform_indices = @transform_4, window_bounds = array<i64: 1, 32>}, {pipeline_mode = #tpu.pipeline_mode<synchronous>, transform_indices = @transform_5, window_bounds = array<i64: 32, 32>}, {pipeline_mode = #tpu.pipeline_mode<synchronous>, transform_indices = @transform_6, window_bounds = array<i64: 1, 32>}, {pipeline_mode = #tpu.pipeline_mode<synchronous>, transform_indices = @transform_7, window_bounds = array<i64: 32, 32>}, {pipeline_mode = #tpu.pipeline_mode<synchronous>, transform_indices = @transform_8, window_bounds = array<i64: 1, 32>}, {transform_indices = @transform_9, window_bounds = array<i64: 2, 16, 32>}]} {
    %c0 = arith.constant 0 : index
    %c0_0 = arith.constant 0 : index
    %c0_1 = arith.constant 0 : index
    %0 = vector.load %arg1[%c0, %c0_0, %c0_1] : memref<2x16x32xf32, #tpu.memory_space<vmem>>, vector<2x16x32xf32>
    %1 = vector.shape_cast %0 : vector<2x16x32xf32> to vector<32x32xf32>
    %c0_2 = arith.constant 0 : index
    %c0_3 = arith.constant 0 : index
    %c0_4 = arith.constant 0 : index
    %2 = vector.load %arg2[%c0_2, %c0_3, %c0_4] : memref<2x16x32xf32, #tpu.memory_space<vmem>>, vector<2x16x32xf32>
    %3 = vector.shape_cast %2 : vector<2x16x32xf32> to vector<32x32xf32>
    %c0_5 = arith.constant 0 : index
    %c0_6 = arith.constant 0 : index
    %c0_7 = arith.constant 0 : index
    %4 = vector.load %arg3[%c0_5, %c0_6, %c0_7] : memref<2x16x32xf32, #tpu.memory_space<vmem>>, vector<2x16x32xf32>
    %5 = vector.shape_cast %4 : vector<2x16x32xf32> to vector<32x32xf32>
    %c0_8 = arith.constant 0 : index
    %c0_9 = arith.constant 0 : index
    %6 = vector.load %arg4[%c0_8, %c0_9] : memref<32x32xf32, #tpu.memory_space<vmem>>, vector<32x32xf32>
    %cst = arith.constant dense<0.000000e+00> : vector<32x32xf32>
    %7 = tpu.matmul %1, %6, %cst {dimension_numbers = #tpu.dot_dimension_numbers<[1], [0], [0], [1], [0, 0, 1, 1], [], []>} : vector<32x32xf32>, vector<32x32xf32>, vector<32x32xf32> -> vector<32x32xf32>
    %c0_10 = arith.constant 0 : index
    %c0_11 = arith.constant 0 : index
    %8 = vector.load %arg5[%c0_10, %c0_11] : memref<1x32xf32, #tpu.memory_space<vmem>>, vector<1x32xf32>
    %9 = vector.broadcast %8 : vector<1x32xf32> to vector<32x32xf32>
    %10 = arith.addf %7, %9 : vector<32x32xf32>
    %c0_12 = arith.constant 0 : index
    %c0_13 = arith.constant 0 : index
    %11 = vector.load %arg6[%c0_12, %c0_13] : memref<32x32xf32, #tpu.memory_space<vmem>>, vector<32x32xf32>
    %cst_14 = arith.constant dense<0.000000e+00> : vector<32x32xf32>
    %12 = tpu.matmul %3, %11, %cst_14 {dimension_numbers = #tpu.dot_dimension_numbers<[1], [0], [0], [1], [0, 0, 1, 1], [], []>} : vector<32x32xf32>, vector<32x32xf32>, vector<32x32xf32> -> vector<32x32xf32>
    %c0_15 = arith.constant 0 : index
    %c0_16 = arith.constant 0 : index
    %13 = vector.load %arg7[%c0_15, %c0_16] : memref<1x32xf32, #tpu.memory_space<vmem>>, vector<1x32xf32>
    %14 = vector.broadcast %13 : vector<1x32xf32> to vector<32x32xf32>
    %15 = arith.addf %12, %14 : vector<32x32xf32>
    %c0_17 = arith.constant 0 : index
    %c0_18 = arith.constant 0 : index
    %16 = vector.load %arg8[%c0_17, %c0_18] : memref<32x32xf32, #tpu.memory_space<vmem>>, vector<32x32xf32>
    %cst_19 = arith.constant dense<0.000000e+00> : vector<32x32xf32>
    %17 = tpu.matmul %5, %16, %cst_19 {dimension_numbers = #tpu.dot_dimension_numbers<[1], [0], [0], [1], [0, 0, 1, 1], [], []>} : vector<32x32xf32>, vector<32x32xf32>, vector<32x32xf32> -> vector<32x32xf32>
    %c0_20 = arith.constant 0 : index
    %c0_21 = arith.constant 0 : index
    %18 = vector.load %arg9[%c0_20, %c0_21] : memref<1x32xf32, #tpu.memory_space<vmem>>, vector<1x32xf32>
    %19 = vector.broadcast %18 : vector<1x32xf32> to vector<32x32xf32>
    %20 = arith.addf %17, %19 : vector<32x32xf32>
    %21 = vector.extract_strided_slice %10 {offsets = [0, 0], sizes = [32, 16], strides = [1, 1]} : vector<32x32xf32> to vector<32x16xf32>
    %22 = vector.shape_cast %21 : vector<32x16xf32> to vector<2x16x16xf32>
    %23 = vector.extract_strided_slice %15 {offsets = [0, 0], sizes = [32, 16], strides = [1, 1]} : vector<32x32xf32> to vector<32x16xf32>
    %24 = vector.shape_cast %23 : vector<32x16xf32> to vector<2x16x16xf32>
    %25 = vector.extract_strided_slice %20 {offsets = [0, 0], sizes = [32, 16], strides = [1, 1]} : vector<32x32xf32> to vector<32x16xf32>
    %26 = vector.shape_cast %25 : vector<32x16xf32> to vector<2x16x16xf32>
    "tpu.trace_start"() <{level = 10 : i32, message = "bqd,bkd->bqk"}> : () -> ()
    %cst_22 = arith.constant dense<0.000000e+00> : vector<2x16x16xf32>
    %27 = tpu.matmul %22, %24, %cst_22 {dimension_numbers = #tpu.dot_dimension_numbers<[2], [2], [1], [1], [0, 0, 0, 1, 1, 1], [0], [0]>} : vector<2x16x16xf32>, vector<2x16x16xf32>, vector<2x16x16xf32> -> vector<2x16x16xf32>
    "tpu.trace_stop"() : () -> ()
    %cst_23 = arith.constant dense<0xFF800000> : vector<2x16xf32>
    %28 = vector.multi_reduction <maximumf>, %27, %cst_23 [2] : vector<2x16x16xf32> to vector<2x16xf32>
    %29 = vector.shape_cast %28 : vector<2x16xf32> to vector<2x16x1xf32>
    %30 = vector.broadcast %29 : vector<2x16x1xf32> to vector<2x16x16xf32>
    %31 = arith.subf %27, %30 : vector<2x16x16xf32>
    %32 = math.exp %31 : vector<2x16x16xf32>
    %cst_24 = arith.constant dense<0.000000e+00> : vector<2x16xf32>
    %33 = vector.multi_reduction <add>, %32, %cst_24 [2] : vector<2x16x16xf32> to vector<2x16xf32>
    %34 = vector.shape_cast %33 : vector<2x16xf32> to vector<2x16x1xf32>
    %35 = tpu.reciprocal %34 {approx = true} : vector<2x16x1xf32> -> vector<2x16x1xf32>
    %36 = vector.broadcast %35 : vector<2x16x1xf32> to vector<2x16x16xf32>
    %37 = arith.mulf %32, %36 : vector<2x16x16xf32>
    "tpu.trace_start"() <{level = 10 : i32, message = "bqk,bkd->bqd"}> : () -> ()
    %cst_25 = arith.constant dense<0.000000e+00> : vector<2x16x16xf32>
    %38 = tpu.matmul %37, %26, %cst_25 {dimension_numbers = #tpu.dot_dimension_numbers<[2], [1], [1], [2], [0, 0, 0, 1, 1, 2], [0], [0]>} : vector<2x16x16xf32>, vector<2x16x16xf32>, vector<2x16x16xf32> -> vector<2x16x16xf32>
    "tpu.trace_stop"() : () -> ()
    %39 = vector.shape_cast %38 : vector<2x16x16xf32> to vector<32x16xf32>
    %40 = vector.extract_strided_slice %10 {offsets = [0, 16], sizes = [32, 16], strides = [1, 1]} : vector<32x32xf32> to vector<32x16xf32>
    %41 = vector.shape_cast %40 : vector<32x16xf32> to vector<2x16x16xf32>
    %42 = vector.extract_strided_slice %15 {offsets = [0, 16], sizes = [32, 16], strides = [1, 1]} : vector<32x32xf32> to vector<32x16xf32>
    %43 = vector.shape_cast %42 : vector<32x16xf32> to vector<2x16x16xf32>
    %44 = vector.extract_strided_slice %20 {offsets = [0, 16], sizes = [32, 16], strides = [1, 1]} : vector<32x32xf32> to vector<32x16xf32>
    %45 = vector.shape_cast %44 : vector<32x16xf32> to vector<2x16x16xf32>
    "tpu.trace_start"() <{level = 10 : i32, message = "bqd,bkd->bqk"}> : () -> ()
    %cst_26 = arith.constant dense<0.000000e+00> : vector<2x16x16xf32>
    %46 = tpu.matmul %41, %43, %cst_26 {dimension_numbers = #tpu.dot_dimension_numbers<[2], [2], [1], [1], [0, 0, 0, 1, 1, 1], [0], [0]>} : vector<2x16x16xf32>, vector<2x16x16xf32>, vector<2x16x16xf32> -> vector<2x16x16xf32>
    "tpu.trace_stop"() : () -> ()
    %cst_27 = arith.constant dense<0xFF800000> : vector<2x16xf32>
    %47 = vector.multi_reduction <maximumf>, %46, %cst_27 [2] : vector<2x16x16xf32> to vector<2x16xf32>
    %48 = vector.shape_cast %47 : vector<2x16xf32> to vector<2x16x1xf32>
    %49 = vector.broadcast %48 : vector<2x16x1xf32> to vector<2x16x16xf32>
    %50 = arith.subf %46, %49 : vector<2x16x16xf32>
    %51 = math.exp %50 : vector<2x16x16xf32>
    %cst_28 = arith.constant dense<0.000000e+00> : vector<2x16xf32>
    %52 = vector.multi_reduction <add>, %51, %cst_28 [2] : vector<2x16x16xf32> to vector<2x16xf32>
    %53 = vector.shape_cast %52 : vector<2x16xf32> to vector<2x16x1xf32>
    %54 = tpu.reciprocal %53 {approx = true} : vector<2x16x1xf32> -> vector<2x16x1xf32>
    %55 = vector.broadcast %54 : vector<2x16x1xf32> to vector<2x16x16xf32>
    %56 = arith.mulf %51, %55 : vector<2x16x16xf32>
    "tpu.trace_start"() <{level = 10 : i32, message = "bqk,bkd->bqd"}> : () -> ()
    %cst_29 = arith.constant dense<0.000000e+00> : vector<2x16x16xf32>
    %57 = tpu.matmul %56, %45, %cst_29 {dimension_numbers = #tpu.dot_dimension_numbers<[2], [1], [1], [2], [0, 0, 0, 1, 1, 2], [0], [0]>} : vector<2x16x16xf32>, vector<2x16x16xf32>, vector<2x16x16xf32> -> vector<2x16x16xf32>
    "tpu.trace_stop"() : () -> ()
    %58 = vector.shape_cast %57 : vector<2x16x16xf32> to vector<32x16xf32>
    %59 = tpu.concatenate %39, %58 in 1 : vector<32x16xf32>, vector<32x16xf32> -> vector<32x32xf32>
    %60 = arith.addf %59, %1 : vector<32x32xf32>
    %61 = vector.shape_cast %60 : vector<32x32xf32> to vector<2x16x32xf32>
    %c0_30 = arith.constant 0 : index
    %c0_31 = arith.constant 0 : index
    %c0_32 = arith.constant 0 : index
    %62 = vector.load %arg10[%c0_30, %c0_31, %c0_32] : memref<2x16x32xf32, #tpu.memory_space<vmem>>, vector<2x16x32xf32>
    tpu.vector_store %arg10[%c0_30, %c0_31, %c0_32], %61 {strides = array<i32>} : memref<2x16x32xf32, #tpu.memory_space<vmem>>, vector<2x16x32xf32>,
    return
  }
  func.func @transform_0(%arg0: i32) -> (i32, i32, i32) {
    %c0_i32 = arith.constant 0 : i32
    %c0_i32_0 = arith.constant 0 : i32
    %c0_i32_1 = arith.constant 0 : i32
    return %arg0, %c0_i32, %c0_i32_0 : i32, i32, i32
  }
  func.func @transform_1(%arg0: i32) -> (i32, i32, i32) {
    %c0_i32 = arith.constant 0 : i32
    %c0_i32_0 = arith.constant 0 : i32
    %c0_i32_1 = arith.constant 0 : i32
    return %arg0, %c0_i32, %c0_i32_0 : i32, i32, i32
  }
  func.func @transform_2(%arg0: i32) -> (i32, i32, i32) {
    %c0_i32 = arith.constant 0 : i32
    %c0_i32_0 = arith.constant 0 : i32
    %c0_i32_1 = arith.constant 0 : i32
    return %arg0, %c0_i32, %c0_i32_0 : i32, i32, i32
  }
  func.func @transform_3(%arg0: i32) -> (i32, i32) {
    %c0_i32 = arith.constant 0 : i32
    %c0_i32_0 = arith.constant 0 : i32
    %c0_i32_1 = arith.constant 0 : i32
    return %c0_i32, %c0_i32_0 : i32, i32
  }
  func.func @transform_4(%arg0: i32) -> (i32, i32) {
    %c0_i32 = arith.constant 0 : i32
    %c0_i32_0 = arith.constant 0 : i32
    %c0_i32_1 = arith.constant 0 : i32
    return %c0_i32, %c0_i32_0 : i32, i32
  }
  func.func @transform_5(%arg0: i32) -> (i32, i32) {
    %c0_i32 = arith.constant 0 : i32
    %c0_i32_0 = arith.constant 0 : i32
    %c0_i32_1 = arith.constant 0 : i32
    return %c0_i32, %c0_i32_0 : i32, i32
  }
  func.func @transform_6(%arg0: i32) -> (i32, i32) {
    %c0_i32 = arith.constant 0 : i32
    %c0_i32_0 = arith.constant 0 : i32
    %c0_i32_1 = arith.constant 0 : i32
    return %c0_i32, %c0_i32_0 : i32, i32
  }
  func.func @transform_7(%arg0: i32) -> (i32, i32) {
    %c0_i32 = arith.constant 0 : i32
    %c0_i32_0 = arith.constant 0 : i32
    %c0_i32_1 = arith.constant 0 : i32
    return %c0_i32, %c0_i32_0 : i32, i32
  }
  func.func @transform_8(%arg0: i32) -> (i32, i32) {
    %c0_i32 = arith.constant 0 : i32
    %c0_i32_0 = arith.constant 0 : i32
    %c0_i32_1 = arith.constant 0 : i32
    return %c0_i32, %c0_i32_0 : i32, i32
  }
  func.func @transform_9(%arg0: i32) -> (i32, i32, i32) {
    %c0_i32 = arith.constant 0 : i32
    %c0_i32_0 = arith.constant 0 : i32
    %c0_i32_1 = arith.constant 0 : i32
    return %arg0, %c0_i32, %c0_i32_0 : i32, i32, i32
  }
}

</mosaic_0001>

<llo_original>
// kernel: tpu_custom_call.1
$region0: #{tpu_custom_call.1}
  #allocation0 [shape = 'u32[]', space=smem, size = 0x4, offset = 0x4, fixed_abs, tag = 'smem constant byte address 0x4 - core index']
  #allocation1 [shape = 'u32[144,128]{1,0:T(1,128)}', space=vmem, size = 0x12000, scoped, tag = 'internal scratch']
  %s0 = inlined_call_operand.hbm [shape: f32[2,16,32], index: 0, kind: input, shape index: {}]
  %s1 = inlined_call_operand.hbm [shape: f32[2,16,32], index: 1, kind: input, shape index: {}]
  %s2 = inlined_call_operand.hbm [shape: f32[2,16,32], index: 2, kind: input, shape index: {}]
  %s3 = inlined_call_operand.hbm [shape: f32[32,32], index: 3, kind: input, shape index: {}]
  %s4 = inlined_call_operand.vmem [shape: f32[1,32], index: 4, kind: input, shape index: {}]
  %s5 = inlined_call_operand.hbm [shape: f32[32,32], index: 5, kind: input, shape index: {}]
  %s6 = inlined_call_operand.vmem [shape: f32[1,32], index: 6, kind: input, shape index: {}]
  %s7 = inlined_call_operand.hbm [shape: f32[32,32], index: 7, kind: input, shape index: {}]
  %s8 = inlined_call_operand.vmem [shape: f32[1,32], index: 8, kind: input, shape index: {}]
  %s9 = inlined_call_operand.hbm [shape: f32[2,16,32], index: 9, kind: output, shape index: {}]
  %s10 = sld [smem:[#allocation0]]
  $region70: #{tpu_custom_call.1} parent=0
    _
  %s12 = ssub.s32 1, %s10
  %s13 = scalar_select 0, %s12, %s10
  $region1: #{tpu_custom_call.1} parent=0
    #allocation2 [shape = 'u8[16384]{0}', space=vmem, size = 0x4000, scoped, tag = 'input window, operand 0, single buffered']
    #allocation3 [shape = 's32[1]{0}', space=sflag, size = 0x4, scoped, tag = 'scoped memory for tpu_custom_call.1']
    #allocation4 [shape = 's32[1]{0}', space=sflag, size = 0x4, scoped, tag = 'scoped memory for tpu_custom_call.1']
    #allocation5 [shape = 'u8[16384]{0}', space=vmem, size = 0x4000, scoped, tag = 'input window, operand 1, single buffered']
    #allocation6 [shape = 's32[1]{0}', space=sflag, size = 0x4, scoped, tag = 'scoped memory for tpu_custom_call.1']
    #allocation7 [shape = 'u8[16384]{0}', space=vmem, size = 0x4000, scoped, tag = 'input window, operand 2, single buffered']
    #allocation8 [shape = 'u8[16384]{0}', space=vmem, size = 0x4000, scoped, tag = 'input window, operand 3, single buffered']
    #allocation9 [shape = 's32[1]{0}', space=sflag, size = 0x4, scoped, tag = 'scoped memory for tpu_custom_call.1']
    #allocation10 [shape = 'u8[16384]{0}', space=vmem, size = 0x4000, scoped, tag = 'input window, operand 5, single buffered']
    #allocation11 [shape = 'u8[16384]{0}', space=vmem, size = 0x4000, scoped, tag = 'input window, operand 7, single buffered']
    #allocation12 [shape = 's32[1]{0}', space=sflag, size = 0x4, scoped, tag = 'scoped memory for tpu_custom_call.1']
    #allocation13 [shape = 'u8[16384]{0}', space=vmem, size = 0x4000, scoped, tag = 'output window, operand 0, single buffered']
    %14 = vsyncpa [#allocation3], 0
    %15 = vsyncpa [#allocation6], 0
    %16 = vsyncpa [#allocation9], 0
    %17 = vsyncpa [#allocation12], 0
    %18 = vsyncpa [#allocation4], 0
    // Predicated region
    $region2: #{tpu_custom_call.1} parent=1 // pred_check
      _
    $region3: #{tpu_custom_call.1} parent=1 // pred_check_branch
      %20 = sbr.rel (0) target = $region5
    $region4: #{tpu_custom_call.1} parent=1 // pred_region
      %s22 = ssub.s32 512, 512
      %23 = vsyncadd [#allocation3], %s22
      %s24 = sshll.u32 [#allocation2], 4
      %s25 = int_to_ptr.vmem [resolvable:$true] %s24
      %30 = dma.hbm_to_vmem [thread:$0]  %s0, 512, %s25, [#allocation3], 128, 128, 8
    $region5: #{tpu_custom_call.1} parent=1 // pred_fallthru
      _
    // Predicated region
    $region6: #{tpu_custom_call.1} parent=1 // pred_check
      _
    $region7: #{tpu_custom_call.1} parent=1 // pred_check_branch
      %32 = sbr.rel (0) target = $region9
    $region8: #{tpu_custom_call.1} parent=1 // pred_region
      %s34 = ssub.s32 512, 512
      %35 = vsyncadd [#allocation6], %s34
      %s36 = sshll.u32 [#allocation5], 4
      %s37 = int_to_ptr.vmem [resolvable:$true] %s36
      %42 = dma.hbm_to_vmem [thread:$0]  %s1, 512, %s37, [#allocation6], 128, 128, 8
    $region9: #{tpu_custom_call.1} parent=1 // pred_fallthru
      _
    // Predicated region
    $region10: #{tpu_custom_call.1} parent=1 // pred_check
      _
    $region11: #{tpu_custom_call.1} parent=1 // pred_check_branch
      %44 = sbr.rel (0) target = $region13
    $region12: #{tpu_custom_call.1} parent=1 // pred_region
      %s46 = ssub.s32 512, 512
      %47 = vsyncadd [#allocation6], %s46
      %s48 = sshll.u32 [#allocation7], 4
      %s49 = int_to_ptr.vmem [resolvable:$true] %s48
      %54 = dma.hbm_to_vmem [thread:$0]  %s2, 512, %s49, [#allocation6], 128, 128, 8
    $region13: #{tpu_custom_call.1} parent=1 // pred_fallthru
      _
    // Predicated region
    $region14: #{tpu_custom_call.1} parent=1 // pred_check
      _
    $region15: #{tpu_custom_call.1} parent=1 // pred_check_branch
      %56 = sbr.rel (0) target = $region17
    $region16: #{tpu_custom_call.1} parent=1 // pred_region
      %s58 = ssub.s32 512, 512
      %59 = vsyncadd [#allocation9], %s58
      %s60 = sshll.u32 [#allocation8], 4
      %s61 = int_to_ptr.vmem [resolvable:$true] %s60
      %66 = dma.hbm_to_vmem [thread:$0]  %s3, 512, %s61, [#allocation9], 128, 128, 8
    $region17: #{tpu_custom_call.1} parent=1 // pred_fallthru
      _
    // Predicated region
    $region18: #{tpu_custom_call.1} parent=1 // pred_check
      _
    $region19: #{tpu_custom_call.1} parent=1 // pred_check_branch
      %68 = sbr.rel (0) target = $region21
    $region20: #{tpu_custom_call.1} parent=1 // pred_region
      _
    $region21: #{tpu_custom_call.1} parent=1 // pred_fallthru
      _
    // Predicated region
    $region22: #{tpu_custom_call.1} parent=1 // pred_check
      _
    $region23: #{tpu_custom_call.1} parent=1 // pred_check_branch
      %70 = sbr.rel (0) target = $region25
    $region24: #{tpu_custom_call.1} parent=1 // pred_region
      %s72 = ssub.s32 512, 512
      %73 = vsyncadd [#allocation9], %s72
      %s74 = sshll.u32 [#allocation10], 4
      %s75 = int_to_ptr.vmem [resolvable:$true] %s74
      %80 = dma.hbm_to_vmem [thread:$0]  %s5, 512, %s75, [#allocation9], 128, 128, 8
    $region25: #{tpu_custom_call.1} parent=1 // pred_fallthru
      _
    // Predicated region
    $region26: #{tpu_custom_call.1} parent=1 // pred_check
      _
    $region27: #{tpu_custom_call.1} parent=1 // pred_check_branch
      %82 = sbr.rel (0) target = $region29
    $region28: #{tpu_custom_call.1} parent=1 // pred_region
      _
    $region29: #{tpu_custom_call.1} parent=1 // pred_fallthru
      _
    // Predicated region
    $region30: #{tpu_custom_call.1} parent=1 // pred_check
      _
    $region31: #{tpu_custom_call.1} parent=1 // pred_check_branch
      %84 = sbr.rel (0) target = $region33
    $region32: #{tpu_custom_call.1} parent=1 // pred_region
      %s86 = ssub.s32 512, 512
      %87 = vsyncadd [#allocation12], %s86
      %s88 = sshll.u32 [#allocation11], 4
      %s89 = int_to_ptr.vmem [resolvable:$true] %s88
      %94 = dma.hbm_to_vmem [thread:$0]  %s7, 512, %s89, [#allocation12], 128, 128, 8
    $region33: #{tpu_custom_call.1} parent=1 // pred_fallthru
      _
    // Predicated region
    $region34: #{tpu_custom_call.1} parent=1 // pred_check
      _
    $region35: #{tpu_custom_call.1} parent=1 // pred_check_branch
      %96 = sbr.rel (0) target = $region37
    $region36: #{tpu_custom_call.1} parent=1 // pred_region
      _
    $region37: #{tpu_custom_call.1} parent=1 // pred_fallthru
      _
    // Predicated region
    $region38: #{tpu_custom_call.1} parent=1 // pred_check
      _
    $region39: #{tpu_custom_call.1} parent=1 // pred_check_branch
      %98 = sbr.rel (0) target = $region41
    $region40: #{tpu_custom_call.1} parent=1 // pred_region
      %99 = dma.done [#allocation3], 512
    $region41: #{tpu_custom_call.1} parent=1 // pred_fallthru
      _
    // Predicated region
    $region42: #{tpu_custom_call.1} parent=1 // pred_check
      _
    $region43: #{tpu_custom_call.1} parent=1 // pred_check_branch
      %101 = sbr.rel (0) target = $region45
    $region44: #{tpu_custom_call.1} parent=1 // pred_region
      %102 = dma.done [#allocation6], 512
    $region45: #{tpu_custom_call.1} parent=1 // pred_fallthru
      _
    // Predicated region
    $region46: #{tpu_custom_call.1} parent=1 // pred_check
      _
    $region47: #{tpu_custom_call.1} parent=1 // pred_check_branch
      %104 = sbr.rel (0) target = $region49
    $region48: #{tpu_custom_call.1} parent=1 // pred_region
      %105 = dma.done [#allocation6], 512
    $region49: #{tpu_custom_call.1} parent=1 // pred_fallthru
      _
    // Predicated region
    $region50: #{tpu_custom_call.1} parent=1 // pred_check
      _
    $region51: #{tpu_custom_call.1} parent=1 // pred_check_branch
      %107 = sbr.rel (0) target = $region53
    $region52: #{tpu_custom_call.1} parent=1 // pred_region
      %108 = dma.done [#allocation9], 512
    $region53: #{tpu_custom_call.1} parent=1 // pred_fallthru
      _
    // Predicated region
    $region54: #{tpu_custom_call.1} parent=1 // pred_check
      _
    $region55: #{tpu_custom_call.1} parent=1 // pred_check_branch
      %110 = sbr.rel (0) target = $region57
    $region56: #{tpu_custom_call.1} parent=1 // pred_region
      %111 = dma.done [#allocation9], 512
    $region57: #{tpu_custom_call.1} parent=1 // pred_fallthru
      _
    // Predicated region
    $region58: #{tpu_custom_call.1} parent=1 // pred_check
      _
    $region59: #{tpu_custom_call.1} parent=1 // pred_check_branch
      %113 = sbr.rel (0) target = $region61
    $region60: #{tpu_custom_call.1} parent=1 // pred_region
      %114 = dma.done [#allocation12], 512
    $region61: #{tpu_custom_call.1} parent=1 // pred_fallthru
      _
    %v115 = vld [vmem:[#allocation2] sm:$0xff]
    %v116 = vld [vmem:[#allocation2 + $0x8] sm:$0xff]
    %v117 = vld [vmem:[#allocation2 + $0x10] sm:$0xff]
    %v118 = vld [vmem:[#allocation2 + $0x18] sm:$0xff]
    %v119 = vld [vmem:[#allocation5] sm:$0xff]
    %v120 = vld [vmem:[#allocation5 + $0x8] sm:$0xff]
    %v121 = vld [vmem:[#allocation5 + $0x10] sm:$0xff]
    %v122 = vld [vmem:[#allocation5 + $0x18] sm:$0xff]
    %v123 = vld [vmem:[#allocation7] sm:$0xff]
    %v124 = vld [vmem:[#allocation7 + $0x8] sm:$0xff]
    %v125 = vld [vmem:[#allocation7 + $0x10] sm:$0xff]
    %v126 = vld [vmem:[#allocation7 + $0x18] sm:$0xff]
    %v127 = vld [vmem:[#allocation8] sm:$0xff]
    %v128 = vld [vmem:[#allocation8 + $0x8] sm:$0xff]
    %v129 = vld [vmem:[#allocation8 + $0x10] sm:$0xff]
    %v130 = vld [vmem:[#allocation8 + $0x18] sm:$0xff]
    %v131 = vld [vmem:[%s4] sm:$0x1]
    %v133 = vlaneseq
    %v134 = vshrl.u32 %v133, 7
    %v135 = vsub.s32 0, %v134
    %v136 = vrot.slane %v131, %v135
    %vm138 = vcmask 261120
    %v140 = vsel %vm138, %v115, 0
    %v143 = vsel %vm138, %v116, 0
    %v146 = vsel %vm138, %v117, 0
    %v149 = vsel %vm138, %v118, 0
    %151 = vmatprep.subr.mxu0 0.0
    %152 = vmatpush1.msra.mxu0 %v127
    %153 = vmatprep.subr.mxu0 0.0
    %154 = vmatpush1.msra.mxu0 %v128
    %155 = vmatprep.subr.mxu0 0.0
    %156 = vmatpush1.msra.mxu0 %v129
    %157 = vmatprep.subr.mxu0 0.0
    %158 = vmatpush1.msra.mxu0 %v130
    %159 = vmatprep.subr.mxu0 0.0
    %160 = vmatpush1.msra.mxu0 0.0
    %161 = vmatprep.subr.mxu0 0.0
    %162 = vmatpush1.msra.mxu0 0.0
    %163 = vmatprep.subr.mxu0 0.0
    %164 = vmatpush1.msra.mxu0 0.0
    %165 = vmatprep.subr.mxu0 0.0
    %166 = vmatpush1.msra.mxu0 0.0
    %167 = vmatprep.subr.mxu0 0.0
    %168 = vmatpush1.msra.mxu0 0.0
    %169 = vmatprep.subr.mxu0 0.0
    %170 = vmatpush1.msra.mxu0 0.0
    %171 = vmatprep.subr.mxu0 0.0
    %172 = vmatpush1.msra.mxu0 0.0
    %173 = vmatprep.subr.mxu0 0.0
    %174 = vmatpush1.msra.mxu0 0.0
    %175 = vmatprep.subr.mxu0 0.0
    %176 = vmatpush1.msra.mxu0 0.0
    %177 = vmatprep.subr.mxu0 0.0
    %178 = vmatpush1.msra.mxu0 0.0
    %179 = vmatprep.subr.mxu0 0.0
    %180 = vmatpush1.msra.mxu0 0.0
    %181 = vmatprep.subr.mxu0 0.0
    %182 = vmatpush1.msra.mxu0 0.0
    %183 = vmatprep.subr.mxu0 0.0
    %184 = vmatpush1.msra.mxu0 0.0
    %185 = vmatprep.subr.mxu0 0.0
    %186 = vmatpush1.msra.mxu0 0.0
    %187 = vmatprep.subr.mxu0 0.0
    %188 = vmatpush1.msra.mxu0 0.0
    %189 = vmatprep.subr.mxu0 0.0
    %190 = vmatpush1.msra.mxu0 0.0
    %191 = vmatprep.subr.mxu0 0.0
    %192 = vmatpush1.msra.mxu0 0.0
    %193 = vmatprep.subr.mxu0 0.0
    %194 = vmatpush1.msra.mxu0 0.0
    %195 = vmatprep.subr.mxu0 0.0
    %196 = vmatpush1.msra.mxu0 0.0
    %197 = vmatprep.subr.mxu0 0.0
    %198 = vmatpush1.msra.mxu0 0.0
    %199 = vmatprep.subr.mxu0 0.0
    %200 = vmatpush1.msra.mxu0 0.0
    %201 = vmatprep.subr.mxu0 0.0
    %202 = vmatpush1.msra.mxu0 0.0
    %203 = vmatprep.subr.mxu0 0.0
    %204 = vmatpush1.msra.mxu0 0.0
    %205 = vmatprep.subr.mxu0 0.0
    %206 = vmatpush1.msra.mxu0 0.0
    %207 = vmatprep.subr.mxu0 0.0
    %208 = vmatpush1.msra.mxu0 0.0
    %209 = vmatprep.subr.mxu0 0.0
    %210 = vmatpush1.msra.mxu0 0.0
    %211 = vmatprep.subr.mxu0 0.0
    %212 = vmatpush1.msra.mxu0 0.0
    %213 = vmatprep.subr.mxu0 0.0
    %214 = vmatpush1.msra.mxu0 0.0
    %215 = vmatprep.mubr.f32.mxu0 0.0
    %216 = vmatmul.mubr.f32.gmra.mrb[0].mxu0 %v140
    %v217 = vpop.f32.mrb[0].mxu0
    %v218 = vadd.f32 %v136, %v217
    %v219 = vpop.f32.mrb[0].mxu0
    %220 = vmatprep.mubr.f32.mxu0 0.0
    %221 = vmatmul.mubr.f32.gmra.mrb[0].mxu0 %v143
    %v222 = vpop.f32.mrb[0].mxu0
    %v223 = vadd.f32 %v136, %v222
    %v224 = vpop.f32.mrb[0].mxu0
    %225 = vmatprep.mubr.f32.mxu0 0.0
    %226 = vmatmul.mubr.f32.gmra.mrb[0].mxu0 %v146
    %v227 = vpop.f32.mrb[0].mxu0
    %v228 = vadd.f32 %v136, %v227
    %v229 = vpop.f32.mrb[0].mxu0
    %230 = vmatprep.mubr.f32.mxu0 0.0
    %231 = vmatmul.mubr.f32.gmra.mrb[0].mxu0 %v149
    %v232 = vpop.f32.mrb[0].mxu0
    %v233 = vadd.f32 %v136, %v232
    %v234 = vpop.f32.mrb[0].mxu0
    %235 = vdwg.mxu0
    %v236 = vld [vmem:[#allocation10] sm:$0xff]
    %v237 = vld [vmem:[#allocation10 + $0x8] sm:$0xff]
    %v238 = vld [vmem:[#allocation10 + $0x10] sm:$0xff]
    %v239 = vld [vmem:[#allocation10 + $0x18] sm:$0xff]
    %v240 = vld [vmem:[%s6] sm:$0x1]
    %v242 = vlaneseq
    %v243 = vshrl.u32 %v242, 7
    %v244 = vsub.s32 0, %v243
    %v245 = vrot.slane %v240, %v244
    %v248 = vsel %vm138, %v119, 0
    %v251 = vsel %vm138, %v120, 0
    %v254 = vsel %vm138, %v121, 0
    %v257 = vsel %vm138, %v122, 0
    %259 = vmatprep.subr.mxu0 0.0
    %260 = vmatpush1.msra.mxu0 %v236
    %261 = vmatprep.subr.mxu0 0.0
    %262 = vmatpush1.msra.mxu0 %v237
    %263 = vmatprep.subr.mxu0 0.0
    %264 = vmatpush1.msra.mxu0 %v238
    %265 = vmatprep.subr.mxu0 0.0
    %266 = vmatpush1.msra.mxu0 %v239
    %267 = vmatprep.subr.mxu0 0.0
    %268 = vmatpush1.msra.mxu0 0.0
    %269 = vmatprep.subr.mxu0 0.0
    %270 = vmatpush1.msra.mxu0 0.0
    %271 = vmatprep.subr.mxu0 0.0
    %272 = vmatpush1.msra.mxu0 0.0
    %273 = vmatprep.subr.mxu0 0.0
    %274 = vmatpush1.msra.mxu0 0.0
    %275 = vmatprep.subr.mxu0 0.0
    %276 = vmatpush1.msra.mxu0 0.0
    %277 = vmatprep.subr.mxu0 0.0
    %278 = vmatpush1.msra.mxu0 0.0
    %279 = vmatprep.subr.mxu0 0.0
    %280 = vmatpush1.msra.mxu0 0.0
    %281 = vmatprep.subr.mxu0 0.0
    %282 = vmatpush1.msra.mxu0 0.0
    %283 = vmatprep.subr.mxu0 0.0
    %284 = vmatpush1.msra.mxu0 0.0
    %285 = vmatprep.subr.mxu0 0.0
    %286 = vmatpush1.msra.mxu0 0.0
    %287 = vmatprep.subr.mxu0 0.0
    %288 = vmatpush1.msra.mxu0 0.0
    %289 = vmatprep.subr.mxu0 0.0
    %290 = vmatpush1.msra.mxu0 0.0
    %291 = vmatprep.subr.mxu0 0.0
    %292 = vmatpush1.msra.mxu0 0.0
    %293 = vmatprep.subr.mxu0 0.0
    %294 = vmatpush1.msra.mxu0 0.0
    %295 = vmatprep.subr.mxu0 0.0
    %296 = vmatpush1.msra.mxu0 0.0
    %297 = vmatprep.subr.mxu0 0.0
    %298 = vmatpush1.msra.mxu0 0.0
    %299 = vmatprep.subr.mxu0 0.0
    %300 = vmatpush1.msra.mxu0 0.0
    %301 = vmatprep.subr.mxu0 0.0
    %302 = vmatpush1.msra.mxu0 0.0
    %303 = vmatprep.subr.mxu0 0.0
    %304 = vmatpush1.msra.mxu0 0.0
    %305 = vmatprep.subr.mxu0 0.0
    %306 = vmatpush1.msra.mxu0 0.0
    %307 = vmatprep.subr.mxu0 0.0
    %308 = vmatpush1.msra.mxu0 0.0
    %309 = vmatprep.subr.mxu0 0.0
    %310 = vmatpush1.msra.mxu0 0.0
    %311 = vmatprep.subr.mxu0 0.0
    %312 = vmatpush1.msra.mxu0 0.0
    %313 = vmatprep.subr.mxu0 0.0
    %314 = vmatpush1.msra.mxu0 0.0
    %315 = vmatprep.subr.mxu0 0.0
    %316 = vmatpush1.msra.mxu0 0.0
    %317 = vmatprep.subr.mxu0 0.0
    %318 = vmatpush1.msra.mxu0 0.0
    %319 = vmatprep.subr.mxu0 0.0
    %320 = vmatpush1.msra.mxu0 0.0
    %321 = vmatprep.subr.mxu0 0.0
    %322 = vmatpush1.msra.mxu0 0.0
    %323 = vmatprep.mubr.f32.mxu0 0.0
    %324 = vmatmul.mubr.f32.gmra.mrb[0].mxu0 %v248
    %v325 = vpop.f32.mrb[0].mxu0
    %v326 = vadd.f32 %v245, %v325
    %v327 = vpop.f32.mrb[0].mxu0
    %328 = vmatprep.mubr.f32.mxu0 0.0
    %329 = vmatmul.mubr.f32.gmra.mrb[0].mxu0 %v251
    %v330 = vpop.f32.mrb[0].mxu0
    %v331 = vadd.f32 %v245, %v330
    %v332 = vpop.f32.mrb[0].mxu0
    %333 = vmatprep.mubr.f32.mxu0 0.0
    %334 = vmatmul.mubr.f32.gmra.mrb[0].mxu0 %v254
    %v335 = vpop.f32.mrb[0].mxu0
    %v336 = vadd.f32 %v245, %v335
    %v337 = vpop.f32.mrb[0].mxu0
    %338 = vmatprep.mubr.f32.mxu0 0.0
    %339 = vmatmul.mubr.f32.gmra.mrb[0].mxu0 %v257
    %v340 = vpop.f32.mrb[0].mxu0
    %v341 = vadd.f32 %v245, %v340
    %v342 = vpop.f32.mrb[0].mxu0
    %343 = vdwg.mxu0
    %v344 = vld [vmem:[#allocation11] sm:$0xff]
    %v345 = vld [vmem:[#allocation11 + $0x8] sm:$0xff]
    %v346 = vld [vmem:[#allocation11 + $0x10] sm:$0xff]
    %v347 = vld [vmem:[#allocation11 + $0x18] sm:$0xff]
    %v348 = vld [vmem:[%s8] sm:$0x1]
    %v350 = vlaneseq
    %v351 = vshrl.u32 %v350, 7
    %v352 = vsub.s32 0, %v351
    %v353 = vrot.slane %v348, %v352
    %v356 = vsel %vm138, %v123, 0
    %v359 = vsel %vm138, %v124, 0
    %v362 = vsel %vm138, %v125, 0
    %v365 = vsel %vm138, %v126, 0
    %367 = vmatprep.subr.mxu0 0.0
    %368 = vmatpush1.msra.mxu0 %v344
    %369 = vmatprep.subr.mxu0 0.0
    %370 = vmatpush1.msra.mxu0 %v345
    %371 = vmatprep.subr.mxu0 0.0
    %372 = vmatpush1.msra.mxu0 %v346
    %373 = vmatprep.subr.mxu0 0.0
    %374 = vmatpush1.msra.mxu0 %v347
    %375 = vmatprep.subr.mxu0 0.0
    %376 = vmatpush1.msra.mxu0 0.0
    %377 = vmatprep.subr.mxu0 0.0
    %378 = vmatpush1.msra.mxu0 0.0
    %379 = vmatprep.subr.mxu0 0.0
    %380 = vmatpush1.msra.mxu0 0.0
    %381 = vmatprep.subr.mxu0 0.0
    %382 = vmatpush1.msra.mxu0 0.0
    %383 = vmatprep.subr.mxu0 0.0
    %384 = vmatpush1.msra.mxu0 0.0
    %385 = vmatprep.subr.mxu0 0.0
    %386 = vmatpush1.msra.mxu0 0.0
    %387 = vmatprep.subr.mxu0 0.0
    %388 = vmatpush1.msra.mxu0 0.0
    %389 = vmatprep.subr.mxu0 0.0
    %390 = vmatpush1.msra.mxu0 0.0
    %391 = vmatprep.subr.mxu0 0.0
    %392 = vmatpush1.msra.mxu0 0.0
    %393 = vmatprep.subr.mxu0 0.0
    %394 = vmatpush1.msra.mxu0 0.0
    %395 = vmatprep.subr.mxu0 0.0
    %396 = vmatpush1.msra.mxu0 0.0
    %397 = vmatprep.subr.mxu0 0.0
    %398 = vmatpush1.msra.mxu0 0.0
    %399 = vmatprep.subr.mxu0 0.0
    %400 = vmatpush1.msra.mxu0 0.0
    %401 = vmatprep.subr.mxu0 0.0
    %402 = vmatpush1.msra.mxu0 0.0
    %403 = vmatprep.subr.mxu0 0.0
    %404 = vmatpush1.msra.mxu0 0.0
    %405 = vmatprep.subr.mxu0 0.0
    %406 = vmatpush1.msra.mxu0 0.0
    %407 = vmatprep.subr.mxu0 0.0
    %408 = vmatpush1.msra.mxu0 0.0
    %409 = vmatprep.subr.mxu0 0.0
    %410 = vmatpush1.msra.mxu0 0.0
    %411 = vmatprep.subr.mxu0 0.0
    %412 = vmatpush1.msra.mxu0 0.0
    %413 = vmatprep.subr.mxu0 0.0
    %414 = vmatpush1.msra.mxu0 0.0
    %415 = vmatprep.subr.mxu0 0.0
    %416 = vmatpush1.msra.mxu0 0.0
    %417 = vmatprep.subr.mxu0 0.0
    %418 = vmatpush1.msra.mxu0 0.0
    %419 = vmatprep.subr.mxu0 0.0
    %420 = vmatpush1.msra.mxu0 0.0
    %421 = vmatprep.subr.mxu0 0.0
    %422 = vmatpush1.msra.mxu0 0.0
    %423 = vmatprep.subr.mxu0 0.0
    %424 = vmatpush1.msra.mxu0 0.0
    %425 = vmatprep.subr.mxu0 0.0
    %426 = vmatpush1.msra.mxu0 0.0
    %427 = vmatprep.subr.mxu0 0.0
    %428 = vmatpush1.msra.mxu0 0.0
    %429 = vmatprep.subr.mxu0 0.0
    %430 = vmatpush1.msra.mxu0 0.0
    %431 = vmatprep.mubr.f32.mxu0 0.0
    %432 = vmatmul.mubr.f32.gmra.mrb[0].mxu0 %v356
    %v433 = vpop.f32.mrb[0].mxu0
    %v434 = vadd.f32 %v353, %v433
    %v435 = vpop.f32.mrb[0].mxu0
    %436 = vmatprep.mubr.f32.mxu0 0.0
    %437 = vmatmul.mubr.f32.gmra.mrb[0].mxu0 %v359
    %v438 = vpop.f32.mrb[0].mxu0
    %v439 = vadd.f32 %v353, %v438
    %v440 = vpop.f32.mrb[0].mxu0
    %441 = vmatprep.mubr.f32.mxu0 0.0
    %442 = vmatmul.mubr.f32.gmra.mrb[0].mxu0 %v362
    %v443 = vpop.f32.mrb[0].mxu0
    %v444 = vadd.f32 %v353, %v443
    %v445 = vpop.f32.mrb[0].mxu0
    %446 = vmatprep.mubr.f32.mxu0 0.0
    %447 = vmatmul.mubr.f32.gmra.mrb[0].mxu0 %v365
    %v448 = vpop.f32.mrb[0].mxu0
    %v449 = vadd.f32 %v353, %v448
    %v450 = vpop.f32.mrb[0].mxu0
    %451 = vdwg.mxu0
    %vm452 = vcmask 130048
    %v454 = vsel %vm452, %v218, 0
    %v457 = vsel %vm452, %v223, 0
    %v460 = vsel %vm452, %v326, 0
    %v463 = vsel %vm452, %v331, 0
    %465 = vmatprep.subr.mxu0 0.0
    %466 = vmatpush1.xpose.msra.mxu0 %v460
    %467 = vmatprep.subr.mxu0 0.0
    %468 = vmatpush1.xpose.msra.mxu0 %v463
    %469 = vmatprep.subr.mxu0 0.0
    %470 = vmatpush1.xpose.msra.mxu0 0.0
    %471 = vmatprep.subr.mxu0 0.0
    %472 = vmatpush1.xpose.msra.mxu0 0.0
    %473 = vmatprep.subr.mxu0 0.0
    %474 = vmatpush1.xpose.msra.mxu0 0.0
    %475 = vmatprep.subr.mxu0 0.0
    %476 = vmatpush1.xpose.msra.mxu0 0.0
    %477 = vmatprep.subr.mxu0 0.0
    %478 = vmatpush1.xpose.msra.mxu0 0.0
    %479 = vmatprep.subr.mxu0 0.0
    %480 = vmatpush1.xpose.msra.mxu0 0.0
    %481 = vmatprep.subr.mxu0 0.0
    %482 = vmatpush1.xpose.msra.mxu0 0.0
    %483 = vmatprep.subr.mxu0 0.0
    %484 = vmatpush1.xpose.msra.mxu0 0.0
    %485 = vmatprep.subr.mxu0 0.0
    %486 = vmatpush1.xpose.msra.mxu0 0.0
    %487 = vmatprep.subr.mxu0 0.0
    %488 = vmatpush1.xpose.msra.mxu0 0.0
    %489 = vmatprep.subr.mxu0 0.0
    %490 = vmatpush1.xpose.msra.mxu0 0.0
    %491 = vmatprep.subr.mxu0 0.0
    %492 = vmatpush1.xpose.msra.mxu0 0.0
    %493 = vmatprep.subr.mxu0 0.0
    %494 = vmatpush1.xpose.msra.mxu0 0.0
    %495 = vmatprep.subr.mxu0 0.0
    %496 = vmatpush1.xpose.msra.mxu0 0.0
    %497 = vmatprep.subr.mxu0 0.0
    %498 = vmatpush1.xpose.msra.mxu0 0.0
    %499 = vmatprep.subr.mxu0 0.0
    %500 = vmatpush1.xpose.msra.mxu0 0.0
    %501 = vmatprep.subr.mxu0 0.0
    %502 = vmatpush1.xpose.msra.mxu0 0.0
    %503 = vmatprep.subr.mxu0 0.0
    %504 = vmatpush1.xpose.msra.mxu0 0.0
    %505 = vmatprep.subr.mxu0 0.0
    %506 = vmatpush1.xpose.msra.mxu0 0.0
    %507 = vmatprep.subr.mxu0 0.0
    %508 = vmatpush1.xpose.msra.mxu0 0.0
    %509 = vmatprep.subr.mxu0 0.0
    %510 = vmatpush1.xpose.msra.mxu0 0.0
    %511 = vmatprep.subr.mxu0 0.0
    %512 = vmatpush1.xpose.msra.mxu0 0.0
    %513 = vmatprep.subr.mxu0 0.0
    %514 = vmatpush1.xpose.msra.mxu0 0.0
    %515 = vmatprep.subr.mxu0 0.0
    %516 = vmatpush1.xpose.msra.mxu0 0.0
    %517 = vmatprep.subr.mxu0 0.0
    %518 = vmatpush1.xpose.msra.mxu0 0.0
    %519 = vmatprep.subr.mxu0 0.0
    %520 = vmatpush1.xpose.msra.mxu0 0.0
    %521 = vmatprep.subr.mxu0 0.0
    %522 = vmatpush1.xpose.msra.mxu0 0.0
    %523 = vmatprep.subr.mxu0 0.0
    %524 = vmatpush1.xpose.msra.mxu0 0.0
    %525 = vmatprep.subr.mxu0 0.0
    %526 = vmatpush1.xpose.msra.mxu0 0.0
    %527 = vmatprep.subr.mxu0 0.0
    %528 = vmatpush1.xpose.msra.mxu0 0.0
    %529 = vmatprep.mubr.f32.mxu0 0.0
    %530 = vmatmul.mubr.f32.gmra.mrb[0].mxu0 %v454
    %v531 = vpop.f32.mrb[0].mxu0
    %v532 = vadd.f32 0.0, %v531
    %v533 = vpop.f32.mrb[0].mxu0
    %534 = vmatprep.mubr.f32.mxu0 0.0
    %535 = vmatmul.mubr.f32.gmra.mrb[0].mxu0 %v457
    %v536 = vpop.f32.mrb[0].mxu0
    %v537 = vadd.f32 0.0, %v536
    %v538 = vpop.f32.mrb[0].mxu0
    %539 = vdwg.mxu0
    %v541 = vsel %vm452, %v228, 0
    %v544 = vsel %vm452, %v233, 0
    %v547 = vsel %vm452, %v336, 0
    %v550 = vsel %vm452, %v341, 0
    %552 = vmatprep.subr.mxu0 0.0
    %553 = vmatpush1.xpose.msra.mxu0 %v547
    %554 = vmatprep.subr.mxu0 0.0
    %555 = vmatpush1.xpose.msra.mxu0 %v550
    %556 = vmatprep.subr.mxu0 0.0
    %557 = vmatpush1.xpose.msra.mxu0 0.0
    %558 = vmatprep.subr.mxu0 0.0
    %559 = vmatpush1.xpose.msra.mxu0 0.0
    %560 = vmatprep.subr.mxu0 0.0
    %561 = vmatpush1.xpose.msra.mxu0 0.0
    %562 = vmatprep.subr.mxu0 0.0
    %563 = vmatpush1.xpose.msra.mxu0 0.0
    %564 = vmatprep.subr.mxu0 0.0
    %565 = vmatpush1.xpose.msra.mxu0 0.0
    %566 = vmatprep.subr.mxu0 0.0
    %567 = vmatpush1.xpose.msra.mxu0 0.0
    %568 = vmatprep.subr.mxu0 0.0
    %569 = vmatpush1.xpose.msra.mxu0 0.0
    %570 = vmatprep.subr.mxu0 0.0
    %571 = vmatpush1.xpose.msra.mxu0 0.0
    %572 = vmatprep.subr.mxu0 0.0
    %573 = vmatpush1.xpose.msra.mxu0 0.0
    %574 = vmatprep.subr.mxu0 0.0
    %575 = vmatpush1.xpose.msra.mxu0 0.0
    %576 = vmatprep.subr.mxu0 0.0
    %577 = vmatpush1.xpose.msra.mxu0 0.0
    %578 = vmatprep.subr.mxu0 0.0
    %579 = vmatpush1.xpose.msra.mxu0 0.0
    %580 = vmatprep.subr.mxu0 0.0
    %581 = vmatpush1.xpose.msra.mxu0 0.0
    %582 = vmatprep.subr.mxu0 0.0
    %583 = vmatpush1.xpose.msra.mxu0 0.0
    %584 = vmatprep.subr.mxu0 0.0
    %585 = vmatpush1.xpose.msra.mxu0 0.0
    %586 = vmatprep.subr.mxu0 0.0
    %587 = vmatpush1.xpose.msra.mxu0 0.0
    %588 = vmatprep.subr.mxu0 0.0
    %589 = vmatpush1.xpose.msra.mxu0 0.0
    %590 = vmatprep.subr.mxu0 0.0
    %591 = vmatpush1.xpose.msra.mxu0 0.0
    %592 = vmatprep.subr.mxu0 0.0
    %593 = vmatpush1.xpose.msra.mxu0 0.0
    %594 = vmatprep.subr.mxu0 0.0
    %595 = vmatpush1.xpose.msra.mxu0 0.0
    %596 = vmatprep.subr.mxu0 0.0
    %597 = vmatpush1.xpose.msra.mxu0 0.0
    %598 = vmatprep.subr.mxu0 0.0
    %599 = vmatpush1.xpose.msra.mxu0 0.0
    %600 = vmatprep.subr.mxu0 0.0
    %601 = vmatpush1.xpose.msra.mxu0 0.0
    %602 = vmatprep.subr.mxu0 0.0
    %603 = vmatpush1.xpose.msra.mxu0 0.0
    %604 = vmatprep.subr.mxu0 0.0
    %605 = vmatpush1.xpose.msra.mxu0 0.0
    %606 = vmatprep.subr.mxu0 0.0
    %607 = vmatpush1.xpose.msra.mxu0 0.0
    %608 = vmatprep.subr.mxu0 0.0
    %609 = vmatpush1.xpose.msra.mxu0 0.0
    %610 = vmatprep.subr.mxu0 0.0
    %611 = vmatpush1.xpose.msra.mxu0 0.0
    %612 = vmatprep.subr.mxu0 0.0
    %613 = vmatpush1.xpose.msra.mxu0 0.0
    %614 = vmatprep.subr.mxu0 0.0
    %615 = vmatpush1.xpose.msra.mxu0 0.0
    %616 = vmatprep.mubr.f32.mxu0 0.0
    %617 = vmatmul.mubr.f32.gmra.mrb[0].mxu0 %v541
    %v618 = vpop.f32.mrb[0].mxu0
    %v619 = vadd.f32 0.0, %v618
    %v620 = vpop.f32.mrb[0].mxu0
    %621 = vmatprep.mubr.f32.mxu0 0.0
    %622 = vmatmul.mubr.f32.gmra.mrb[0].mxu0 %v544
    %v623 = vpop.f32.mrb[0].mxu0
    %v624 = vadd.f32 0.0, %v623
    %v625 = vpop.f32.mrb[0].mxu0
    %626 = vdwg.mxu0
    %v627 = vsel %vm452, %v532, -inf
    %628 = vmax.xlane.f32.xlu0 %v627
    %v629 = vpop.xlane.xlu0 %628
    %v630 = vsel %vm452, %v537, -inf
    %631 = vmax.xlane.f32.xlu0 %v630
    %v632 = vpop.xlane.xlu0 %631
    %v633 = vsel %vm452, %v619, -inf
    %634 = vmax.xlane.f32.xlu0 %v633
    %v635 = vpop.xlane.xlu0 %634
    %v636 = vsel %vm452, %v624, -inf
    %637 = vmax.xlane.f32.xlu0 %v636
    %v638 = vpop.xlane.xlu0 %637
    %v639 = vsub.f32 %v532, %v629
    %v640 = vsub.f32 %v537, %v632
    %v641 = vsub.f32 %v619, %v635
    %v642 = vsub.f32 %v624, %v638
    %v643 = vmul.f32 %v639, 1.442695
    %v644 = vpow.pop %v643
    %v645 = vmul.f32 %v640, 1.442695
    %v646 = vpow.pop %v645
    %v647 = vmul.f32 %v641, 1.442695
    %v648 = vpow.pop %v647
    %v649 = vmul.f32 %v642, 1.442695
    %v650 = vpow.pop %v649
    %v651 = vsel %vm452, %v644, 0.0
    %652 = vadd.xlane.f32.xlu0 %v651
    %v653 = vpop.xlane.xlu0 %652
    %v654 = vsel %vm452, %v646, 0.0
    %655 = vadd.xlane.f32.xlu0 %v654
    %v656 = vpop.xlane.xlu0 %655
    %v657 = vsel %vm452, %v648, 0.0
    %658 = vadd.xlane.f32.xlu0 %v657
    %v659 = vpop.xlane.xlu0 %658
    %v660 = vsel %vm452, %v650, 0.0
    %661 = vadd.xlane.f32.xlu0 %v660
    %v662 = vpop.xlane.xlu0 %661
    %v663 = vrcp.pop %v653
    %v664 = vrcp.pop %v656
    %v665 = vrcp.pop %v659
    %v666 = vrcp.pop %v662
    %v667 = vmul.f32 %v644, %v663
    %v668 = vmul.f32 %v646, %v664
    %v669 = vmul.f32 %v648, %v665
    %v670 = vmul.f32 %v650, %v666
    %v672 = vsel %vm452, %v667, 0
    %v675 = vsel %vm452, %v668, 0
    %677 = vmatprep.subr.mxu0 0.0
    %678 = vmatpush1.msra.mxu0 %v434
    %679 = vmatprep.subr.mxu0 0.0
    %680 = vmatpush1.msra.mxu0 %v439
    %681 = vmatprep.subr.mxu0 0.0
    %682 = vmatpush1.msra.mxu0 0.0
    %683 = vmatprep.subr.mxu0 0.0
    %684 = vmatpush1.msra.mxu0 0.0
    %685 = vmatprep.subr.mxu0 0.0
    %686 = vmatpush1.msra.mxu0 0.0
    %687 = vmatprep.subr.mxu0 0.0
    %688 = vmatpush1.msra.mxu0 0.0
    %689 = vmatprep.subr.mxu0 0.0
    %690 = vmatpush1.msra.mxu0 0.0
    %691 = vmatprep.subr.mxu0 0.0
    %692 = vmatpush1.msra.mxu0 0.0
    %693 = vmatprep.subr.mxu0 0.0
    %694 = vmatpush1.msra.mxu0 0.0
    %695 = vmatprep.subr.mxu0 0.0
    %696 = vmatpush1.msra.mxu0 0.0
    %697 = vmatprep.subr.mxu0 0.0
    %698 = vmatpush1.msra.mxu0 0.0
    %699 = vmatprep.subr.mxu0 0.0
    %700 = vmatpush1.msra.mxu0 0.0
    %701 = vmatprep.subr.mxu0 0.0
    %702 = vmatpush1.msra.mxu0 0.0
    %703 = vmatprep.subr.mxu0 0.0
    %704 = vmatpush1.msra.mxu0 0.0
    %705 = vmatprep.subr.mxu0 0.0
    %706 = vmatpush1.msra.mxu0 0.0
    %707 = vmatprep.subr.mxu0 0.0
    %708 = vmatpush1.msra.mxu0 0.0
    %709 = vmatprep.subr.mxu0 0.0
    %710 = vmatpush1.msra.mxu0 0.0
    %711 = vmatprep.subr.mxu0 0.0
    %712 = vmatpush1.msra.mxu0 0.0
    %713 = vmatprep.subr.mxu0 0.0
    %714 = vmatpush1.msra.mxu0 0.0
    %715 = vmatprep.subr.mxu0 0.0
    %716 = vmatpush1.msra.mxu0 0.0
    %717 = vmatprep.subr.mxu0 0.0
    %718 = vmatpush1.msra.mxu0 0.0
    %719 = vmatprep.subr.mxu0 0.0
    %720 = vmatpush1.msra.mxu0 0.0
    %721 = vmatprep.subr.mxu0 0.0
    %722 = vmatpush1.msra.mxu0 0.0
    %723 = vmatprep.subr.mxu0 0.0
    %724 = vmatpush1.msra.mxu0 0.0
    %725 = vmatprep.subr.mxu0 0.0
    %726 = vmatpush1.msra.mxu0 0.0
    %727 = vmatprep.subr.mxu0 0.0
    %728 = vmatpush1.msra.mxu0 0.0
    %729 = vmatprep.subr.mxu0 0.0
    %730 = vmatpush1.msra.mxu0 0.0
    %731 = vmatprep.subr.mxu0 0.0
    %732 = vmatpush1.msra.mxu0 0.0
    %733 = vmatprep.subr.mxu0 0.0
    %734 = vmatpush1.msra.mxu0 0.0
    %735 = vmatprep.subr.mxu0 0.0
    %736 = vmatpush1.msra.mxu0 0.0
    %737 = vmatprep.subr.mxu0 0.0
    %738 = vmatpush1.msra.mxu0 0.0
    %739 = vmatprep.subr.mxu0 0.0
    %740 = vmatpush1.msra.mxu0 0.0
    %741 = vmatprep.mubr.f32.mxu0 0.0
    %742 = vmatmul.mubr.f32.gmra.mrb[0].mxu0 %v672
    %v743 = vpop.f32.mrb[0].mxu0
    %v744 = vadd.f32 0.0, %v743
    %v745 = vpop.f32.mrb[0].mxu0
    %746 = vmatprep.mubr.f32.mxu0 0.0
    %747 = vmatmul.mubr.f32.gmra.mrb[0].mxu0 %v675
    %v748 = vpop.f32.mrb[0].mxu0
    %v749 = vadd.f32 0.0, %v748
    %v750 = vpop.f32.mrb[0].mxu0
    %751 = vdwg.mxu0
    %v753 = vsel %vm452, %v669, 0
    %v756 = vsel %vm452, %v670, 0
    %758 = vmatprep.subr.mxu0 0.0
    %759 = vmatpush1.msra.mxu0 %v444
    %760 = vmatprep.subr.mxu0 0.0
    %761 = vmatpush1.msra.mxu0 %v449
    %762 = vmatprep.subr.mxu0 0.0
    %763 = vmatpush1.msra.mxu0 0.0
    %764 = vmatprep.subr.mxu0 0.0
    %765 = vmatpush1.msra.mxu0 0.0
    %766 = vmatprep.subr.mxu0 0.0
    %767 = vmatpush1.msra.mxu0 0.0
    %768 = vmatprep.subr.mxu0 0.0
    %769 = vmatpush1.msra.mxu0 0.0
    %770 = vmatprep.subr.mxu0 0.0
    %771 = vmatpush1.msra.mxu0 0.0
    %772 = vmatprep.subr.mxu0 0.0
    %773 = vmatpush1.msra.mxu0 0.0
    %774 = vmatprep.subr.mxu0 0.0
    %775 = vmatpush1.msra.mxu0 0.0
    %776 = vmatprep.subr.mxu0 0.0
    %777 = vmatpush1.msra.mxu0 0.0
    %778 = vmatprep.subr.mxu0 0.0
    %779 = vmatpush1.msra.mxu0 0.0
    %780 = vmatprep.subr.mxu0 0.0
    %781 = vmatpush1.msra.mxu0 0.0
    %782 = vmatprep.subr.mxu0 0.0
    %783 = vmatpush1.msra.mxu0 0.0
    %784 = vmatprep.subr.mxu0 0.0
    %785 = vmatpush1.msra.mxu0 0.0
    %786 = vmatprep.subr.mxu0 0.0
    %787 = vmatpush1.msra.mxu0 0.0
    %788 = vmatprep.subr.mxu0 0.0
    %789 = vmatpush1.msra.mxu0 0.0
    %790 = vmatprep.subr.mxu0 0.0
    %791 = vmatpush1.msra.mxu0 0.0
    %792 = vmatprep.subr.mxu0 0.0
    %793 = vmatpush1.msra.mxu0 0.0
    %794 = vmatprep.subr.mxu0 0.0
    %795 = vmatpush1.msra.mxu0 0.0
    %796 = vmatprep.subr.mxu0 0.0
    %797 = vmatpush1.msra.mxu0 0.0
    %798 = vmatprep.subr.mxu0 0.0
    %799 = vmatpush1.msra.mxu0 0.0
    %800 = vmatprep.subr.mxu0 0.0
    %801 = vmatpush1.msra.mxu0 0.0
    %802 = vmatprep.subr.mxu0 0.0
    %803 = vmatpush1.msra.mxu0 0.0
    %804 = vmatprep.subr.mxu0 0.0
    %805 = vmatpush1.msra.mxu0 0.0
    %806 = vmatprep.subr.mxu0 0.0
    %807 = vmatpush1.msra.mxu0 0.0
    %808 = vmatprep.subr.mxu0 0.0
    %809 = vmatpush1.msra.mxu0 0.0
    %810 = vmatprep.subr.mxu0 0.0
    %811 = vmatpush1.msra.mxu0 0.0
    %812 = vmatprep.subr.mxu0 0.0
    %813 = vmatpush1.msra.mxu0 0.0
    %814 = vmatprep.subr.mxu0 0.0
    %815 = vmatpush1.msra.mxu0 0.0
    %816 = vmatprep.subr.mxu0 0.0
    %817 = vmatpush1.msra.mxu0 0.0
    %818 = vmatprep.subr.mxu0 0.0
    %819 = vmatpush1.msra.mxu0 0.0
    %820 = vmatprep.subr.mxu0 0.0
    %821 = vmatpush1.msra.mxu0 0.0
    %822 = vmatprep.mubr.f32.mxu0 0.0
    %823 = vmatmul.mubr.f32.gmra.mrb[0].mxu0 %v753
    %v824 = vpop.f32.mrb[0].mxu0
    %v825 = vadd.f32 0.0, %v824
    %v826 = vpop.f32.mrb[0].mxu0
    %827 = vmatprep.mubr.f32.mxu0 0.0
    %828 = vmatmul.mubr.f32.gmra.mrb[0].mxu0 %v756
    %v829 = vpop.f32.mrb[0].mxu0
    %v830 = vadd.f32 0.0, %v829
    %v831 = vpop.f32.mrb[0].mxu0
    %832 = vdwg.mxu0
    %833 = vrot.lane.b32.xlu0 %v218, 112
    %v834 = vpop.permute.xlu0 %833
    %835 = vrot.lane.b32.xlu0 %v223, 112
    %v836 = vpop.permute.xlu0 %835
    %837 = vrot.lane.b32.xlu0 %v326, 112
    %v838 = vpop.permute.xlu0 %837
    %839 = vrot.lane.b32.xlu0 %v331, 112
    %v840 = vpop.permute.xlu0 %839
    %v841 = vsel %vm452, %v834, 0
    %v843 = vsel %vm452, %v836, 0
    %v845 = vsel %vm452, %v838, 0
    %v847 = vsel %vm452, %v840, 0
    %849 = vmatprep.subr.mxu0 0.0
    %850 = vmatpush1.xpose.msra.mxu0 %v845
    %851 = vmatprep.subr.mxu0 0.0
    %852 = vmatpush1.xpose.msra.mxu0 %v847
    %853 = vmatprep.subr.mxu0 0.0
    %854 = vmatpush1.xpose.msra.mxu0 0.0
    %855 = vmatprep.subr.mxu0 0.0
    %856 = vmatpush1.xpose.msra.mxu0 0.0
    %857 = vmatprep.subr.mxu0 0.0
    %858 = vmatpush1.xpose.msra.mxu0 0.0
    %859 = vmatprep.subr.mxu0 0.0
    %860 = vmatpush1.xpose.msra.mxu0 0.0
    %861 = vmatprep.subr.mxu0 0.0
    %862 = vmatpush1.xpose.msra.mxu0 0.0
    %863 = vmatprep.subr.mxu0 0.0
    %864 = vmatpush1.xpose.msra.mxu0 0.0
    %865 = vmatprep.subr.mxu0 0.0
    %866 = vmatpush1.xpose.msra.mxu0 0.0
    %867 = vmatprep.subr.mxu0 0.0
    %868 = vmatpush1.xpose.msra.mxu0 0.0
    %869 = vmatprep.subr.mxu0 0.0
    %870 = vmatpush1.xpose.msra.mxu0 0.0
    %871 = vmatprep.subr.mxu0 0.0
    %872 = vmatpush1.xpose.msra.mxu0 0.0
    %873 = vmatprep.subr.mxu0 0.0
    %874 = vmatpush1.xpose.msra.mxu0 0.0
    %875 = vmatprep.subr.mxu0 0.0
    %876 = vmatpush1.xpose.msra.mxu0 0.0
    %877 = vmatprep.subr.mxu0 0.0
    %878 = vmatpush1.xpose.msra.mxu0 0.0
    %879 = vmatprep.subr.mxu0 0.0
    %880 = vmatpush1.xpose.msra.mxu0 0.0
    %881 = vmatprep.subr.mxu0 0.0
    %882 = vmatpush1.xpose.msra.mxu0 0.0
    %883 = vmatprep.subr.mxu0 0.0
    %884 = vmatpush1.xpose.msra.mxu0 0.0
    %885 = vmatprep.subr.mxu0 0.0
    %886 = vmatpush1.xpose.msra.mxu0 0.0
    %887 = vmatprep.subr.mxu0 0.0
    %888 = vmatpush1.xpose.msra.mxu0 0.0
    %889 = vmatprep.subr.mxu0 0.0
    %890 = vmatpush1.xpose.msra.mxu0 0.0
    %891 = vmatprep.subr.mxu0 0.0
    %892 = vmatpush1.xpose.msra.mxu0 0.0
    %893 = vmatprep.subr.mxu0 0.0
    %894 = vmatpush1.xpose.msra.mxu0 0.0
    %895 = vmatprep.subr.mxu0 0.0
    %896 = vmatpush1.xpose.msra.mxu0 0.0
    %897 = vmatprep.subr.mxu0 0.0
    %898 = vmatpush1.xpose.msra.mxu0 0.0
    %899 = vmatprep.subr.mxu0 0.0
    %900 = vmatpush1.xpose.msra.mxu0 0.0
    %901 = vmatprep.subr.mxu0 0.0
    %902 = vmatpush1.xpose.msra.mxu0 0.0
    %903 = vmatprep.subr.mxu0 0.0
    %904 = vmatpush1.xpose.msra.mxu0 0.0
    %905 = vmatprep.subr.mxu0 0.0
    %906 = vmatpush1.xpose.msra.mxu0 0.0
    %907 = vmatprep.subr.mxu0 0.0
    %908 = vmatpush1.xpose.msra.mxu0 0.0
    %909 = vmatprep.subr.mxu0 0.0
    %910 = vmatpush1.xpose.msra.mxu0 0.0
    %911 = vmatprep.subr.mxu0 0.0
    %912 = vmatpush1.xpose.msra.mxu0 0.0
    %913 = vmatprep.mubr.f32.mxu0 0.0
    %914 = vmatmul.mubr.f32.gmra.mrb[0].mxu0 %v841
    %v915 = vpop.f32.mrb[0].mxu0
    %v916 = vadd.f32 0.0, %v915
    %v917 = vpop.f32.mrb[0].mxu0
    %918 = vmatprep.mubr.f32.mxu0 0.0
    %919 = vmatmul.mubr.f32.gmra.mrb[0].mxu0 %v843
    %v920 = vpop.f32.mrb[0].mxu0
    %v921 = vadd.f32 0.0, %v920
    %v922 = vpop.f32.mrb[0].mxu0
    %923 = vdwg.mxu0
    %924 = vrot.lane.b32.xlu0 %v228, 112
    %v925 = vpop.permute.xlu0 %924
    %926 = vrot.lane.b32.xlu0 %v233, 112
    %v927 = vpop.permute.xlu0 %926
    %928 = vrot.lane.b32.xlu0 %v336, 112
    %v929 = vpop.permute.xlu0 %928
    %930 = vrot.lane.b32.xlu0 %v341, 112
    %v931 = vpop.permute.xlu0 %930
    %v932 = vsel %vm452, %v925, 0
    %v934 = vsel %vm452, %v927, 0
    %v936 = vsel %vm452, %v929, 0
    %v938 = vsel %vm452, %v931, 0
    %940 = vmatprep.subr.mxu0 0.0
    %941 = vmatpush1.xpose.msra.mxu0 %v936
    %942 = vmatprep.subr.mxu0 0.0
    %943 = vmatpush1.xpose.msra.mxu0 %v938
    %944 = vmatprep.subr.mxu0 0.0
    %945 = vmatpush1.xpose.msra.mxu0 0.0
    %946 = vmatprep.subr.mxu0 0.0
    %947 = vmatpush1.xpose.msra.mxu0 0.0
    %948 = vmatprep.subr.mxu0 0.0
    %949 = vmatpush1.xpose.msra.mxu0 0.0
    %950 = vmatprep.subr.mxu0 0.0
    %951 = vmatpush1.xpose.msra.mxu0 0.0
    %952 = vmatprep.subr.mxu0 0.0
    %953 = vmatpush1.xpose.msra.mxu0 0.0
    %954 = vmatprep.subr.mxu0 0.0
    %955 = vmatpush1.xpose.msra.mxu0 0.0
    %956 = vmatprep.subr.mxu0 0.0
    %957 = vmatpush1.xpose.msra.mxu0 0.0
    %958 = vmatprep.subr.mxu0 0.0
    %959 = vmatpush1.xpose.msra.mxu0 0.0
    %960 = vmatprep.subr.mxu0 0.0
    %961 = vmatpush1.xpose.msra.mxu0 0.0
    %962 = vmatprep.subr.mxu0 0.0
    %963 = vmatpush1.xpose.msra.mxu0 0.0
    %964 = vmatprep.subr.mxu0 0.0
    %965 = vmatpush1.xpose.msra.mxu0 0.0
    %966 = vmatprep.subr.mxu0 0.0
    %967 = vmatpush1.xpose.msra.mxu0 0.0
    %968 = vmatprep.subr.mxu0 0.0
    %969 = vmatpush1.xpose.msra.mxu0 0.0
    %970 = vmatprep.subr.mxu0 0.0
    %971 = vmatpush1.xpose.msra.mxu0 0.0
    %972 = vmatprep.subr.mxu0 0.0
    %973 = vmatpush1.xpose.msra.mxu0 0.0
    %974 = vmatprep.subr.mxu0 0.0
    %975 = vmatpush1.xpose.msra.mxu0 0.0
    %976 = vmatprep.subr.mxu0 0.0
    %977 = vmatpush1.xpose.msra.mxu0 0.0
    %978 = vmatprep.subr.mxu0 0.0
    %979 = vmatpush1.xpose.msra.mxu0 0.0
    %980 = vmatprep.subr.mxu0 0.0
    %981 = vmatpush1.xpose.msra.mxu0 0.0
    %982 = vmatprep.subr.mxu0 0.0
    %983 = vmatpush1.xpose.msra.mxu0 0.0
    %984 = vmatprep.subr.mxu0 0.0
    %985 = vmatpush1.xpose.msra.mxu0 0.0
    %986 = vmatprep.subr.mxu0 0.0
    %987 = vmatpush1.xpose.msra.mxu0 0.0
    %988 = vmatprep.subr.mxu0 0.0
    %989 = vmatpush1.xpose.msra.mxu0 0.0
    %990 = vmatprep.subr.mxu0 0.0
    %991 = vmatpush1.xpose.msra.mxu0 0.0
    %992 = vmatprep.subr.mxu0 0.0
    %993 = vmatpush1.xpose.msra.mxu0 0.0
    %994 = vmatprep.subr.mxu0 0.0
    %995 = vmatpush1.xpose.msra.mxu0 0.0
    %996 = vmatprep.subr.mxu0 0.0
    %997 = vmatpush1.xpose.msra.mxu0 0.0
    %998 = vmatprep.subr.mxu0 0.0
    %999 = vmatpush1.xpose.msra.mxu0 0.0
    %1000 = vmatprep.subr.mxu0 0.0
    %1001 = vmatpush1.xpose.msra.mxu0 0.0
    %1002 = vmatprep.subr.mxu0 0.0
    %1003 = vmatpush1.xpose.msra.mxu0 0.0
    %1004 = vmatprep.mubr.f32.mxu0 0.0
    %1005 = vmatmul.mubr.f32.gmra.mrb[0].mxu0 %v932
    %v1006 = vpop.f32.mrb[0].mxu0
    %v1007 = vadd.f32 0.0, %v1006
    %v1008 = vpop.f32.mrb[0].mxu0
    %1009 = vmatprep.mubr.f32.mxu0 0.0
    %1010 = vmatmul.mubr.f32.gmra.mrb[0].mxu0 %v934
    %v1011 = vpop.f32.mrb[0].mxu0
    %v1012 = vadd.f32 0.0, %v1011
    %v1013 = vpop.f32.mrb[0].mxu0
    %1014 = vdwg.mxu0
    %v1015 = vsel %vm452, %v916, -inf
    %1016 = vmax.xlane.f32.xlu0 %v1015
    %v1017 = vpop.xlane.xlu0 %1016
    %v1018 = vsel %vm452, %v921, -inf
    %1019 = vmax.xlane.f32.xlu0 %v1018
    %v1020 = vpop.xlane.xlu0 %1019
    %v1021 = vsel %vm452, %v1007, -inf
    %1022 = vmax.xlane.f32.xlu0 %v1021
    %v1023 = vpop.xlane.xlu0 %1022
    %v1024 = vsel %vm452, %v1012, -inf
    %1025 = vmax.xlane.f32.xlu0 %v1024
    %v1026 = vpop.xlane.xlu0 %1025
    %v1027 = vsub.f32 %v916, %v1017
    %v1028 = vsub.f32 %v921, %v1020
    %v1029 = vsub.f32 %v1007, %v1023
    %v1030 = vsub.f32 %v1012, %v1026
    %v1031 = vmul.f32 %v1027, 1.442695
    %v1032 = vpow.pop %v1031
    %v1033 = vmul.f32 %v1028, 1.442695
    %v1034 = vpow.pop %v1033
    %v1035 = vmul.f32 %v1029, 1.442695
    %v1036 = vpow.pop %v1035
    %v1037 = vmul.f32 %v1030, 1.442695
    %v1038 = vpow.pop %v1037
    %v1039 = vsel %vm452, %v1032, 0.0
    %1040 = vadd.xlane.f32.xlu0 %v1039
    %v1041 = vpop.xlane.xlu0 %1040
    %v1042 = vsel %vm452, %v1034, 0.0
    %1043 = vadd.xlane.f32.xlu0 %v1042
    %v1044 = vpop.xlane.xlu0 %1043
    %v1045 = vsel %vm452, %v1036, 0.0
    %1046 = vadd.xlane.f32.xlu0 %v1045
    %v1047 = vpop.xlane.xlu0 %1046
    %v1048 = vsel %vm452, %v1038, 0.0
    %1049 = vadd.xlane.f32.xlu0 %v1048
    %v1050 = vpop.xlane.xlu0 %1049
    %v1051 = vrcp.pop %v1041
    %v1052 = vrcp.pop %v1044
    %v1053 = vrcp.pop %v1047
    %v1054 = vrcp.pop %v1050
    %v1055 = vmul.f32 %v1032, %v1051
    %v1056 = vmul.f32 %v1034, %v1052
    %v1057 = vmul.f32 %v1036, %v1053
    %v1058 = vmul.f32 %v1038, %v1054
    %1061 = vrot.lane.b32.xlu0 %v434, 112
    %v1062 = vpop.permute.xlu0 %1061
    %1063 = vrot.lane.b32.xlu0 %v439, 112
    %v1064 = vpop.permute.xlu0 %1063
    %v1068 = vsel %vm452, %v1055, 0
    %v1071 = vsel %vm452, %v1056, 0
    %1073 = vmatprep.subr.mxu0 0.0
    %1074 = vmatpush1.msra.mxu0 %v1062
    %1075 = vmatprep.subr.mxu0 0.0
    %1076 = vmatpush1.msra.mxu0 %v1064
    %1077 = vmatprep.subr.mxu0 0.0
    %1078 = vmatpush1.msra.mxu0 0.0
    %1079 = vmatprep.subr.mxu0 0.0
    %1080 = vmatpush1.msra.mxu0 0.0
    %1081 = vmatprep.subr.mxu0 0.0
    %1082 = vmatpush1.msra.mxu0 0.0
    %1083 = vmatprep.subr.mxu0 0.0
    %1084 = vmatpush1.msra.mxu0 0.0
    %1085 = vmatprep.subr.mxu0 0.0
    %1086 = vmatpush1.msra.mxu0 0.0
    %1087 = vmatprep.subr.mxu0 0.0
    %1088 = vmatpush1.msra.mxu0 0.0
    %1089 = vmatprep.subr.mxu0 0.0
    %1090 = vmatpush1.msra.mxu0 0.0
    %1091 = vmatprep.subr.mxu0 0.0
    %1092 = vmatpush1.msra.mxu0 0.0
    %1093 = vmatprep.subr.mxu0 0.0
    %1094 = vmatpush1.msra.mxu0 0.0
    %1095 = vmatprep.subr.mxu0 0.0
    %1096 = vmatpush1.msra.mxu0 0.0
    %1097 = vmatprep.subr.mxu0 0.0
    %1098 = vmatpush1.msra.mxu0 0.0
    %1099 = vmatprep.subr.mxu0 0.0
    %1100 = vmatpush1.msra.mxu0 0.0
    %1101 = vmatprep.subr.mxu0 0.0
    %1102 = vmatpush1.msra.mxu0 0.0
    %1103 = vmatprep.subr.mxu0 0.0
    %1104 = vmatpush1.msra.mxu0 0.0
    %1105 = vmatprep.subr.mxu0 0.0
    %1106 = vmatpush1.msra.mxu0 0.0
    %1107 = vmatprep.subr.mxu0 0.0
    %1108 = vmatpush1.msra.mxu0 0.0
    %1109 = vmatprep.subr.mxu0 0.0
    %1110 = vmatpush1.msra.mxu0 0.0
    %1111 = vmatprep.subr.mxu0 0.0
    %1112 = vmatpush1.msra.mxu0 0.0
    %1113 = vmatprep.subr.mxu0 0.0
    %1114 = vmatpush1.msra.mxu0 0.0
    %1115 = vmatprep.subr.mxu0 0.0
    %1116 = vmatpush1.msra.mxu0 0.0
    %1117 = vmatprep.subr.mxu0 0.0
    %1118 = vmatpush1.msra.mxu0 0.0
    %1119 = vmatprep.subr.mxu0 0.0
    %1120 = vmatpush1.msra.mxu0 0.0
    %1121 = vmatprep.subr.mxu0 0.0
    %1122 = vmatpush1.msra.mxu0 0.0
    %1123 = vmatprep.subr.mxu0 0.0
    %1124 = vmatpush1.msra.mxu0 0.0
    %1125 = vmatprep.subr.mxu0 0.0
    %1126 = vmatpush1.msra.mxu0 0.0
    %1127 = vmatprep.subr.mxu0 0.0
    %1128 = vmatpush1.msra.mxu0 0.0
    %1129 = vmatprep.subr.mxu0 0.0
    %1130 = vmatpush1.msra.mxu0 0.0
    %1131 = vmatprep.subr.mxu0 0.0
    %1132 = vmatpush1.msra.mxu0 0.0
    %1133 = vmatprep.subr.mxu0 0.0
    %1134 = vmatpush1.msra.mxu0 0.0
    %1135 = vmatprep.subr.mxu0 0.0
    %1136 = vmatpush1.msra.mxu0 0.0
    %1137 = vmatprep.mubr.f32.mxu0 0.0
    %1138 = vmatmul.mubr.f32.gmra.mrb[0].mxu0 %v1068
    %v1139 = vpop.f32.mrb[0].mxu0
    %v1140 = vadd.f32 0.0, %v1139
    %v1141 = vpop.f32.mrb[0].mxu0
    %1142 = vmatprep.mubr.f32.mxu0 0.0
    %1143 = vmatmul.mubr.f32.gmra.mrb[0].mxu0 %v1071
    %v1144 = vpop.f32.mrb[0].mxu0
    %v1145 = vadd.f32 0.0, %v1144
    %v1146 = vpop.f32.mrb[0].mxu0
    %1147 = vdwg.mxu0
    %1150 = vrot.lane.b32.xlu0 %v444, 112
    %v1151 = vpop.permute.xlu0 %1150
    %1152 = vrot.lane.b32.xlu0 %v449, 112
    %v1153 = vpop.permute.xlu0 %1152
    %v1157 = vsel %vm452, %v1057, 0
    %v1160 = vsel %vm452, %v1058, 0
    %1162 = vmatprep.subr.mxu0 0.0
    %1163 = vmatpush1.msra.mxu0 %v1151
    %1164 = vmatprep.subr.mxu0 0.0
    %1165 = vmatpush1.msra.mxu0 %v1153
    %1166 = vmatprep.subr.mxu0 0.0
    %1167 = vmatpush1.msra.mxu0 0.0
    %1168 = vmatprep.subr.mxu0 0.0
    %1169 = vmatpush1.msra.mxu0 0.0
    %1170 = vmatprep.subr.mxu0 0.0
    %1171 = vmatpush1.msra.mxu0 0.0
    %1172 = vmatprep.subr.mxu0 0.0
    %1173 = vmatpush1.msra.mxu0 0.0
    %1174 = vmatprep.subr.mxu0 0.0
    %1175 = vmatpush1.msra.mxu0 0.0
    %1176 = vmatprep.subr.mxu0 0.0
    %1177 = vmatpush1.msra.mxu0 0.0
    %1178 = vmatprep.subr.mxu0 0.0
    %1179 = vmatpush1.msra.mxu0 0.0
    %1180 = vmatprep.subr.mxu0 0.0
    %1181 = vmatpush1.msra.mxu0 0.0
    %1182 = vmatprep.subr.mxu0 0.0
    %1183 = vmatpush1.msra.mxu0 0.0
    %1184 = vmatprep.subr.mxu0 0.0
    %1185 = vmatpush1.msra.mxu0 0.0
    %1186 = vmatprep.subr.mxu0 0.0
    %1187 = vmatpush1.msra.mxu0 0.0
    %1188 = vmatprep.subr.mxu0 0.0
    %1189 = vmatpush1.msra.mxu0 0.0
    %1190 = vmatprep.subr.mxu0 0.0
    %1191 = vmatpush1.msra.mxu0 0.0
    %1192 = vmatprep.subr.mxu0 0.0
    %1193 = vmatpush1.msra.mxu0 0.0
    %1194 = vmatprep.subr.mxu0 0.0
    %1195 = vmatpush1.msra.mxu0 0.0
    %1196 = vmatprep.subr.mxu0 0.0
    %1197 = vmatpush1.msra.mxu0 0.0
    %1198 = vmatprep.subr.mxu0 0.0
    %1199 = vmatpush1.msra.mxu0 0.0
    %1200 = vmatprep.subr.mxu0 0.0
    %1201 = vmatpush1.msra.mxu0 0.0
    %1202 = vmatprep.subr.mxu0 0.0
    %1203 = vmatpush1.msra.mxu0 0.0
    %1204 = vmatprep.subr.mxu0 0.0
    %1205 = vmatpush1.msra.mxu0 0.0
    %1206 = vmatprep.subr.mxu0 0.0
    %1207 = vmatpush1.msra.mxu0 0.0
    %1208 = vmatprep.subr.mxu0 0.0
    %1209 = vmatpush1.msra.mxu0 0.0
    %1210 = vmatprep.subr.mxu0 0.0
    %1211 = vmatpush1.msra.mxu0 0.0
    %1212 = vmatprep.subr.mxu0 0.0
    %1213 = vmatpush1.msra.mxu0 0.0
    %1214 = vmatprep.subr.mxu0 0.0
    %1215 = vmatpush1.msra.mxu0 0.0
    %1216 = vmatprep.subr.mxu0 0.0
    %1217 = vmatpush1.msra.mxu0 0.0
    %1218 = vmatprep.subr.mxu0 0.0
    %1219 = vmatpush1.msra.mxu0 0.0
    %1220 = vmatprep.subr.mxu0 0.0
    %1221 = vmatpush1.msra.mxu0 0.0
    %1222 = vmatprep.subr.mxu0 0.0
    %1223 = vmatpush1.msra.mxu0 0.0
    %1224 = vmatprep.subr.mxu0 0.0
    %1225 = vmatpush1.msra.mxu0 0.0
    %1226 = vmatprep.mubr.f32.mxu0 0.0
    %1227 = vmatmul.mubr.f32.gmra.mrb[0].mxu0 %v1157
    %v1228 = vpop.f32.mrb[0].mxu0
    %v1229 = vadd.f32 0.0, %v1228
    %v1230 = vpop.f32.mrb[0].mxu0
    %1231 = vmatprep.mubr.f32.mxu0 0.0
    %1232 = vmatmul.mubr.f32.gmra.mrb[0].mxu0 %v1160
    %v1233 = vpop.f32.mrb[0].mxu0
    %v1234 = vadd.f32 0.0, %v1233
    %v1235 = vpop.f32.mrb[0].mxu0
    %1236 = vdwg.mxu0
    %1241 = vrot.lane.b32.xlu0 %v1140, 16
    %v1242 = vpop.permute.xlu0 %1241
    %1243 = vrot.lane.b32.xlu0 %v1145, 16
    %v1244 = vpop.permute.xlu0 %1243
    %1245 = vrot.lane.b32.xlu0 %v1229, 16
    %v1246 = vpop.permute.xlu0 %1245
    %1247 = vrot.lane.b32.xlu0 %v1234, 16
    %v1248 = vpop.permute.xlu0 %1247
    %v1253 = vsel %vm452, %v744, %v1242
    %v1254 = vsel %vm452, %v749, %v1244
    %v1255 = vsel %vm452, %v825, %v1246
    %v1256 = vsel %vm452, %v830, %v1248
    %v1257 = vadd.f32 %v1253, %v115
    %v1258 = vadd.f32 %v1254, %v116
    %v1259 = vadd.f32 %v1255, %v117
    %v1260 = vadd.f32 %v1256, %v118
    %1261 = vst.msk [vmem:[#allocation13] sm:$0xff] %vm138, %v1257
    %1262 = vst.msk [vmem:[#allocation13 + $0x8] sm:$0xff] %vm138, %v1258
    %1263 = vst.msk [vmem:[#allocation13 + $0x10] sm:$0xff] %vm138, %v1259
    %1264 = vst.msk [vmem:[#allocation13 + $0x18] sm:$0xff] %vm138, %v1260
    // Predicated region
    $region62: #{tpu_custom_call.1} parent=1 // pred_check
      _
    $region63: #{tpu_custom_call.1} parent=1 // pred_check_branch
      %1266 = sbr.rel (0) target = $region65
    $region64: #{tpu_custom_call.1} parent=1 // pred_region
      %s1268 = ssub.s32 512, 512
      %1269 = vsyncadd [#allocation4], %s1268
      %s1270 = sshll.u32 [#allocation13], 4
      %s1271 = int_to_ptr.vmem [resolvable:$true] %s1270
      %1276 = dma.vmem_to_hbm [thread:$0]  %s1271, 512, %s9, [#allocation4], 128, 128, 8
    $region65: #{tpu_custom_call.1} parent=1 // pred_fallthru
      _
    // Predicated region
    $region66: #{tpu_custom_call.1} parent=1 // pred_check
      _
    $region67: #{tpu_custom_call.1} parent=1 // pred_check_branch
      %1278 = sbr.rel (0) target = $region69
    $region68: #{tpu_custom_call.1} parent=1 // pred_region
      %1279 = dma.done [#allocation4], 512
    $region69: #{tpu_custom_call.1} parent=1 // pred_fallthru
      _
    %1280 = vsyncpa [#allocation3], 1
    %1281 = vsyncpa [#allocation6], 1
    %1282 = vsyncpa [#allocation9], 1
    %1283 = vsyncpa [#allocation12], 1
    %1284 = vsyncpa [#allocation4], 1

</llo_original>
